<compile_context>
chip_gen: v7x
topology: tpu7x:2x2x1
jax: 0.10.0
libtpu: 0.0.40
codegen_flags: <defaults>
</compile_context>

<pallas_src>
import functools

import jax
import jax.numpy as jnp
from jax.experimental import pallas as pl
from jax.experimental.pallas import tpu as pltpu

LANE = 128


def _round_up(x, m):
    return ((x + m - 1) // m) * m


@functools.lru_cache(maxsize=None)
def _vmem_capacity_bytes():
    """Physical VMEM of the attached TPU generation (fallback: v7x's 64 MiB)."""
    try:
        cap = getattr(pltpu.get_tpu_info(), "vmem_capacity_bytes", None)
        if cap:
            return int(cap)
    except Exception:
        pass
    return 64 << 20


def _vmem_limit(est_bytes):
    cap = _vmem_capacity_bytes()
    return int(min(max(est_bytes, 32 << 20), cap - (16 << 20)))


# --------------------------------------------------------------------------- #
# Stage 1: edge MLP (TSAEncoder approximation), one pass over the edges.
# --------------------------------------------------------------------------- #
def edge_mlp_kernel(x_ref, w1_ref, b1_ref, w2_ref, b2_ref, emb_ref):
    h1 = jnp.dot(x_ref[...], w1_ref[...],
                 preferred_element_type=jnp.float32) + b1_ref[...]
    h1 = jnp.maximum(h1, 0.0)                                      # ReLU
    emb = jnp.dot(h1.astype(jnp.bfloat16), w2_ref[...],
                  preferred_element_type=jnp.float32) + b2_ref[...]
    emb_ref[...] = emb.astype(emb_ref.dtype)                       # bf16 out


# --------------------------------------------------------------------------- #
# Stage 2: incidence aggregation (H @ edge_emb) + EdgeToNodeConv linear +
#          leaky_relu + output linear.  grid = (node_tiles, edge_tiles),
#          edge axis is the reduction (f32 accumulator, pl.when init/final).
# --------------------------------------------------------------------------- #
def aggregate_kernel(h_ref, emb_ref, wc_ref, bc_ref, wl_ref, o_ref, acc_ref):
    k = pl.program_id(1)

    @pl.when(k == 0)
    def _init():
        acc_ref[...] = jnp.zeros_like(acc_ref)

    # H tile is int8 ({0,1}, exact); cast to bf16 right before the MXU dot.
    acc_ref[...] += jnp.dot(h_ref[...].astype(jnp.bfloat16), emb_ref[...],
                            preferred_element_type=jnp.float32)    # [tn, Hp] f32

    @pl.when(k == pl.num_programs(1) - 1)
    def _finalize():
        # Keep the accumulator in f32 through both linears (weights are
        # bf16-rounded; activations / accumulation stay f32).
        node = jnp.dot(acc_ref[...], wc_ref[...].astype(jnp.float32),
                       preferred_element_type=jnp.float32) + bc_ref[...]
        node = jnp.where(node > 0.0, node, 0.2 * node)             # leaky_relu(0.2)
        o_ref[...] = jnp.dot(node, wl_ref[...].astype(jnp.float32),
                             preferred_element_type=jnp.float32
                             ).astype(o_ref.dtype)


@functools.partial(jax.jit, static_argnames=("out_size", "node_tile", "edge_tile"))
def edge_gcn_forward(x, H, edge_index, params, out_size,
                     node_tile=512, edge_tile=2048):
    """x: [E, F] edge features; H: [N, E] node-edge incidence ({0,1})."""
    del edge_index  # TODO(synk): consumed by the (unavailable) TGAT attention.
    w1, b1, w2, b2, wc, bc, wl = params

    E, F = x.shape
    N = H.shape[0]
    hidden = w1.shape[1]

    # Lane-dense padded dims (multiples of 128).
    f_pad = _round_up(F, LANE)
    h_pad = _round_up(hidden, LANE)
    o_pad = _round_up(out_size, LANE)

    # Edge tile / padding.
    te = min(edge_tile, _round_up(E, LANE))
    e_pad = _round_up(E, te)

    # Node tile: keep >= 2 node tiles when possible so v7x's two TensorCores
    # both get work along the "parallel" axis.
    n_lane = _round_up(N, LANE)
    tn = min(node_tile, n_lane)
    if n_lane >= 2 * LANE and n_lane // tn < 2:
        tn = _round_up(n_lane // 2, LANE)
    n_pad = _round_up(N, tn)

    bf16, f32 = jnp.bfloat16, jnp.float32

    # Pad / cast operands.  H is {0,1} -> int8 is exact and halves HBM traffic.
    x_p = jnp.zeros((e_pad, f_pad), bf16).at[:E, :F].set(x.astype(bf16))
    H_p = jnp.zeros((n_pad, e_pad), jnp.int8).at[:N, :E].set(H.astype(jnp.int8))

    w1_p = jnp.zeros((f_pad, h_pad), bf16).at[:F, :hidden].set(w1.astype(bf16))
    b1_p = jnp.zeros((1, h_pad), f32).at[:, :hidden].set(b1.astype(f32))
    w2_p = jnp.zeros((h_pad, h_pad), bf16).at[:hidden, :hidden].set(w2.astype(bf16))
    b2_p = jnp.zeros((1, h_pad), f32).at[:, :hidden].set(b2.astype(f32))
    wc_p = jnp.zeros((h_pad, h_pad), bf16).at[:hidden, :hidden].set(wc.astype(bf16))
    bc_p = jnp.zeros((1, h_pad), f32).at[:, :hidden].set(bc.astype(f32))
    wl_p = jnp.zeros((h_pad, o_pad), bf16).at[:hidden, :out_size].set(wl.astype(bf16))

    # ----------------------- Stage 1: edge MLP ----------------------------- #
    def const1(shape):
        return pl.BlockSpec(shape, lambda k: (0,) * len(shape))

    mlp_est = (2 * (2 * te * (f_pad + h_pad) * 2                    # x / emb dbl-buf
                    + 2 * ((f_pad + h_pad) * h_pad * 2 + 2 * h_pad * 4)
                    + 4 * te * h_pad * 4)                           # temps
               + (4 << 20))

    edge_emb = pl.pallas_call(
        edge_mlp_kernel,
        out_shape=jax.ShapeDtypeStruct((e_pad, h_pad), bf16),
        grid_spec=pltpu.PrefetchScalarGridSpec(
            num_scalar_prefetch=0,
            grid=(e_pad // te,),
            in_specs=[
                pl.BlockSpec((te, f_pad), lambda k: (k, 0)),        # x tile
                const1((f_pad, h_pad)),                             # w1
                const1((1, h_pad)),                                 # b1
                const1((h_pad, h_pad)),                             # w2
                const1((1, h_pad)),                                 # b2
            ],
            out_specs=pl.BlockSpec((te, h_pad), lambda k: (k, 0)),
        ),
        compiler_params=pltpu.CompilerParams(
            dimension_semantics=("parallel",),
            vmem_limit_bytes=_vmem_limit(mlp_est),
        ),
    )(x_p, w1_p, b1_p, w2_p, b2_p)

    # ------------------ Stage 2: aggregation + linears --------------------- #
    def const2(shape):
        return pl.BlockSpec(shape, lambda i, k: (0,) * len(shape))

    agg_est = (2 * (2 * (tn * te * 1 + te * h_pad * 2 + tn * o_pad * 4)  # streams
                    + 2 * (2 * h_pad * h_pad * 2 + h_pad * 4 + h_pad * o_pad * 2)
                    + tn * h_pad * 4                                     # acc
                    + 4 * tn * h_pad * 4)                                # temps
               + (4 << 20))

    out_p = pl.pallas_call(
        aggregate_kernel,
        out_shape=jax.ShapeDtypeStruct((n_pad, o_pad), f32),
        grid_spec=pltpu.PrefetchScalarGridSpec(
            num_scalar_prefetch=0,
            grid=(n_pad // tn, e_pad // te),
            in_specs=[
                pl.BlockSpec((tn, te), lambda i, k: (i, k)),        # H tile (int8)
                pl.BlockSpec((te, h_pad), lambda i, k: (k, 0)),     # edge_emb tile
                const2((h_pad, h_pad)),                             # wc
                const2((1, h_pad)),                                 # bc
                const2((h_pad, o_pad)),                             # wl
            ],
            out_specs=pl.BlockSpec((tn, o_pad), lambda i, k: (i, 0)),
            scratch_shapes=[pltpu.VMEM((tn, h_pad), jnp.float32)],
        ),
        compiler_params=pltpu.CompilerParams(
            dimension_semantics=("parallel", "arbitrary"),
            vmem_limit_bytes=_vmem_limit(agg_est),
        ),
    )(H_p, edge_emb, wc_p, bc_p, wl_p)

    return out_p[:N, :out_size]


# --------------------------------------------------------------------------- #
# Init + reference
# --------------------------------------------------------------------------- #
def _glorot(key, shape):
    fan_in, fan_out = shape[0], shape[1]
    limit = (6.0 / (fan_in + fan_out)) ** 0.5
    return jax.random.uniform(key, shape, jnp.float32, -limit, limit)


def init_params(key, num_features, hidden_size, out_size):
    ks = jax.random.split(key, 5)
    w1 = _glorot(ks[0], (num_features, hidden_size))
    b1 = jnp.zeros((1, hidden_size), jnp.float32)
    w2 = _glorot(ks[1], (hidden_size, hidden_size))
    b2 = jnp.zeros((1, hidden_size), jnp.float32)
    wc = _glorot(ks[2], (hidden_size, hidden_size))
    bc = jnp.zeros((1, hidden_size), jnp.float32)
    wl = _glorot(ks[3], (hidden_size, out_size))      # Linear(..., bias=False, 'glorot')
    return (w1, b1, w2, b2, wc, bc, wl)


def edge_gcn_reference(x, H, params, out_size):
    """Plain-JAX reference mirroring the kernel's bf16 rounding of weights /
    streamed edge embeddings; aggregation and activations stay f32."""
    def bf(a):
        return a.astype(jnp.bfloat16).astype(jnp.float32)
    w1, b1, w2, b2, wc, bc, wl = params
    h1 = jnp.maximum(bf(x) @ bf(w1) + b1, 0.0)
    edge_emb = bf(bf(h1) @ bf(w2) + b2)               # stored bf16 between kernels
    node = (H @ edge_emb) @ bf(wc) + bc               # H is {0,1} -> exact
    node = jnp.where(node > 0.0, node, 0.2 * node)
    return node @ bf(wl)


if __name__ == "__main__":
    # Small, module-consistent shapes.
    num_nodes = 16
    num_edges = 24
    num_features = 4        # timestamp_size
    hidden_size = 32
    out_size = 8

    root = jax.random.PRNGKey(0)
    k_x, k_h, k_ei, k_p = jax.random.split(root, 4)

    x = jax.random.normal(k_x, (num_edges, num_features), jnp.float32)
    # Node-edge incidence matrix (dense), entries in {0, 1}.
    H = (jax.random.uniform(k_h, (num_nodes, num_edges)) > 0.7).astype(jnp.float32)
    edge_index = jax.random.randint(k_ei, (2, num_edges), 0, num_nodes, jnp.int32)

    params = init_params(k_p, num_features, hidden_size, out_size)

    out = edge_gcn_forward(x, H, edge_index, params, out_size)
    out = jax.block_until_ready(out)

    assert out.shape == (num_nodes, out_size), out.shape
    assert out.dtype == jnp.float32
    assert bool(jnp.all(jnp.isfinite(out)))

    ref = edge_gcn_reference(x, H, params, out_size)
    assert bool(jnp.allclose(out, ref, rtol=5e-2, atol=5e-2))

    print("KERNEL_OK")
</pallas_src>

<mosaic_0001>
module attributes {stable_mosaic.version = 11 : i64} {
  func.func @edge_mlp_kernel(%arg0: i32, %arg1: memref<128x128xbf16, #tpu.memory_space<vmem>>, %arg2: memref<128x128xbf16, #tpu.memory_space<vmem>>, %arg3: memref<1x128xf32, #tpu.memory_space<vmem>>, %arg4: memref<128x128xbf16, #tpu.memory_space<vmem>>, %arg5: memref<1x128xf32, #tpu.memory_space<vmem>>, %arg6: memref<128x128xbf16, #tpu.memory_space<vmem>>) attributes {dimension_semantics = [#tpu.dimension_semantics<parallel>], iteration_bounds = array<i64: 1>, scalar_prefetch = 0 : i64, scratch_operands = 0 : i64, tpu.core_type = #tpu.core_type<tc>, window_params = [{transform_indices = @transform_0, window_bounds = array<i64: 128, 128>}, {pipeline_mode = #tpu.pipeline_mode<synchronous>, transform_indices = @transform_1, window_bounds = array<i64: 128, 128>}, {pipeline_mode = #tpu.pipeline_mode<synchronous>, transform_indices = @transform_2, window_bounds = array<i64: 1, 128>}, {pipeline_mode = #tpu.pipeline_mode<synchronous>, transform_indices = @transform_3, window_bounds = array<i64: 128, 128>}, {pipeline_mode = #tpu.pipeline_mode<synchronous>, transform_indices = @transform_4, window_bounds = array<i64: 1, 128>}, {transform_indices = @transform_5, window_bounds = array<i64: 128, 128>}]} {
    %c0 = arith.constant 0 : index
    %c0_0 = arith.constant 0 : index
    %0 = vector.load %arg1[%c0, %c0_0] : memref<128x128xbf16, #tpu.memory_space<vmem>>, vector<128x128xbf16>
    %c0_1 = arith.constant 0 : index
    %c0_2 = arith.constant 0 : index
    %1 = vector.load %arg2[%c0_1, %c0_2] : memref<128x128xbf16, #tpu.memory_space<vmem>>, vector<128x128xbf16>
    %cst = arith.constant dense<0.000000e+00> : vector<128x128xf32>
    %2 = tpu.matmul %0, %1, %cst {dimension_numbers = #tpu.dot_dimension_numbers<[1], [0], [0], [1], [0, 0, 1, 1], [], []>} : vector<128x128xbf16>, vector<128x128xbf16>, vector<128x128xf32> -> vector<128x128xf32>
    %c0_3 = arith.constant 0 : index
    %c0_4 = arith.constant 0 : index
    %3 = vector.load %arg3[%c0_3, %c0_4] : memref<1x128xf32, #tpu.memory_space<vmem>>, vector<1x128xf32>
    %4 = vector.broadcast %3 : vector<1x128xf32> to vector<128x128xf32>
    %5 = arith.addf %2, %4 : vector<128x128xf32>
    %cst_5 = arith.constant 0.000000e+00 : f32
    %6 = vector.broadcast %cst_5 : f32 to vector<128x128xf32>
    %7 = arith.maximumf %5, %6 : vector<128x128xf32>
    %8 = arith.truncf %7 : vector<128x128xf32> to vector<128x128xbf16>
    %c0_6 = arith.constant 0 : index
    %c0_7 = arith.constant 0 : index
    %9 = vector.load %arg4[%c0_6, %c0_7] : memref<128x128xbf16, #tpu.memory_space<vmem>>, vector<128x128xbf16>
    %cst_8 = arith.constant dense<0.000000e+00> : vector<128x128xf32>
    %10 = tpu.matmul %8, %9, %cst_8 {dimension_numbers = #tpu.dot_dimension_numbers<[1], [0], [0], [1], [0, 0, 1, 1], [], []>} : vector<128x128xbf16>, vector<128x128xbf16>, vector<128x128xf32> -> vector<128x128xf32>
    %c0_9 = arith.constant 0 : index
    %c0_10 = arith.constant 0 : index
    %11 = vector.load %arg5[%c0_9, %c0_10] : memref<1x128xf32, #tpu.memory_space<vmem>>, vector<1x128xf32>
    %12 = vector.broadcast %11 : vector<1x128xf32> to vector<128x128xf32>
    %13 = arith.addf %10, %12 : vector<128x128xf32>
    %14 = arith.truncf %13 : vector<128x128xf32> to vector<128x128xbf16>
    %c0_11 = arith.constant 0 : index
    %c0_12 = arith.constant 0 : index
    %15 = vector.load %arg6[%c0_11, %c0_12] : memref<128x128xbf16, #tpu.memory_space<vmem>>, vector<128x128xbf16>
    tpu.vector_store %arg6[%c0_11, %c0_12], %14 {strides = array<i32>} : memref<128x128xbf16, #tpu.memory_space<vmem>>, vector<128x128xbf16>,
    return
  }
  func.func @transform_0(%arg0: i32) -> (i32, i32) {
    %c0_i32 = arith.constant 0 : i32
    %c0_i32_0 = arith.constant 0 : i32
    return %arg0, %c0_i32 : i32, i32
  }
  func.func @transform_1(%arg0: i32) -> (i32, i32) {
    %c0_i32 = arith.constant 0 : i32
    %c0_i32_0 = arith.constant 0 : i32
    %c0_i32_1 = arith.constant 0 : i32
    return %c0_i32, %c0_i32_0 : i32, i32
  }
  func.func @transform_2(%arg0: i32) -> (i32, i32) {
    %c0_i32 = arith.constant 0 : i32
    %c0_i32_0 = arith.constant 0 : i32
    %c0_i32_1 = arith.constant 0 : i32
    return %c0_i32, %c0_i32_0 : i32, i32
  }
  func.func @transform_3(%arg0: i32) -> (i32, i32) {
    %c0_i32 = arith.constant 0 : i32
    %c0_i32_0 = arith.constant 0 : i32
    %c0_i32_1 = arith.constant 0 : i32
    return %c0_i32, %c0_i32_0 : i32, i32
  }
  func.func @transform_4(%arg0: i32) -> (i32, i32) {
    %c0_i32 = arith.constant 0 : i32
    %c0_i32_0 = arith.constant 0 : i32
    %c0_i32_1 = arith.constant 0 : i32
    return %c0_i32, %c0_i32_0 : i32, i32
  }
  func.func @transform_5(%arg0: i32) -> (i32, i32) {
    %c0_i32 = arith.constant 0 : i32
    %c0_i32_0 = arith.constant 0 : i32
    return %arg0, %c0_i32 : i32, i32
  }
}

module attributes {stable_mosaic.version = 11 : i64} {
  func.func @aggregate_kernel(%arg0: i32, %arg1: i32, %arg2: memref<128x128xi8, #tpu.memory_space<vmem>>, %arg3: memref<128x128xbf16, #tpu.memory_space<vmem>>, %arg4: memref<128x128xbf16, #tpu.memory_space<vmem>>, %arg5: memref<1x128xf32, #tpu.memory_space<vmem>>, %arg6: memref<128x128xbf16, #tpu.memory_space<vmem>>, %arg7: memref<128x128xf32, #tpu.memory_space<vmem>>, %arg8: memref<128x128xf32, #tpu.memory_space<vmem>>) attributes {dimension_semantics = [#tpu.dimension_semantics<parallel>, #tpu.dimension_semantics<arbitrary>], iteration_bounds = array<i64: 1, 1>, scalar_prefetch = 0 : i64, scratch_operands = 1 : i64, tpu.core_type = #tpu.core_type<tc>, window_params = [{transform_indices = @transform_0, window_bounds = array<i64: 128, 128>}, {transform_indices = @transform_1, window_bounds = array<i64: 128, 128>}, {pipeline_mode = #tpu.pipeline_mode<synchronous>, transform_indices = @transform_2, window_bounds = array<i64: 128, 128>}, {pipeline_mode = #tpu.pipeline_mode<synchronous>, transform_indices = @transform_3, window_bounds = array<i64: 1, 128>}, {pipeline_mode = #tpu.pipeline_mode<synchronous>, transform_indices = @transform_4, window_bounds = array<i64: 128, 128>}, {transform_indices = @transform_5, window_bounds = array<i64: 128, 128>}]} {
    %c0_i32 = arith.constant 0 : i32
    %0 = arith.cmpi eq, %arg1, %c0_i32 : i32
    %1 = arith.extui %0 : i1 to i32
    %c0_i32_0 = arith.constant 0 : i32
    %2 = arith.cmpi ne, %1, %c0_i32_0 : i32
    scf.if %2 {
      %cst_10 = arith.constant 0.000000e+00 : f32
      %13 = vector.broadcast %cst_10 : f32 to vector<128x128xf32>
      %c0_11 = arith.constant 0 : index
      %c0_12 = arith.constant 0 : index
      %14 = vector.load %arg8[%c0_11, %c0_12] : memref<128x128xf32, #tpu.memory_space<vmem>>, vector<128x128xf32>
      tpu.vector_store %arg8[%c0_11, %c0_12], %13 {strides = array<i32>} : memref<128x128xf32, #tpu.memory_space<vmem>>, vector<128x128xf32>,
    } else {
    }
    %c0 = arith.constant 0 : index
    %c0_1 = arith.constant 0 : index
    %3 = vector.load %arg8[%c0, %c0_1] : memref<128x128xf32, #tpu.memory_space<vmem>>, vector<128x128xf32>
    %c0_2 = arith.constant 0 : index
    %c0_3 = arith.constant 0 : index
    %4 = vector.load %arg2[%c0_2, %c0_3] : memref<128x128xi8, #tpu.memory_space<vmem>>, vector<128x128xi8>
    %5 = arith.sitofp %4 : vector<128x128xi8> to vector<128x128xbf16>
    %c0_4 = arith.constant 0 : index
    %c0_5 = arith.constant 0 : index
    %6 = vector.load %arg3[%c0_4, %c0_5] : memref<128x128xbf16, #tpu.memory_space<vmem>>, vector<128x128xbf16>
    %cst = arith.constant dense<0.000000e+00> : vector<128x128xf32>
    %7 = tpu.matmul %5, %6, %cst {dimension_numbers = #tpu.dot_dimension_numbers<[1], [0], [0], [1], [0, 0, 1, 1], [], []>} : vector<128x128xbf16>, vector<128x128xbf16>, vector<128x128xf32> -> vector<128x128xf32>
    %8 = arith.addf %3, %7 : vector<128x128xf32>
    %c0_6 = arith.constant 0 : index
    %c0_7 = arith.constant 0 : index
    %9 = vector.load %arg8[%c0_6, %c0_7] : memref<128x128xf32, #tpu.memory_space<vmem>>, vector<128x128xf32>
    tpu.vector_store %arg8[%c0_6, %c0_7], %8 {strides = array<i32>} : memref<128x128xf32, #tpu.memory_space<vmem>>, vector<128x128xf32>,
    %c0_i32_8 = arith.constant 0 : i32
    %10 = arith.cmpi eq, %arg1, %c0_i32_8 : i32
    %11 = arith.extui %10 : i1 to i32
    %c0_i32_9 = arith.constant 0 : i32
    %12 = arith.cmpi ne, %11, %c0_i32_9 : i32
    scf.if %12 {
      %c0_10 = arith.constant 0 : index
      %c0_11 = arith.constant 0 : index
      %13 = vector.load %arg8[%c0_10, %c0_11] : memref<128x128xf32, #tpu.memory_space<vmem>>, vector<128x128xf32>
      %c0_12 = arith.constant 0 : index
      %c0_13 = arith.constant 0 : index
      %14 = vector.load %arg4[%c0_12, %c0_13] : memref<128x128xbf16, #tpu.memory_space<vmem>>, vector<128x128xbf16>
      %15 = arith.extf %14 : vector<128x128xbf16> to vector<128x128xf32>
      %cst_14 = arith.constant dense<0.000000e+00> : vector<128x128xf32>
      %16 = tpu.matmul %13, %15, %cst_14 {dimension_numbers = #tpu.dot_dimension_numbers<[1], [0], [0], [1], [0, 0, 1, 1], [], []>} : vector<128x128xf32>, vector<128x128xf32>, vector<128x128xf32> -> vector<128x128xf32>
      %c0_15 = arith.constant 0 : index
      %c0_16 = arith.constant 0 : index
      %17 = vector.load %arg5[%c0_15, %c0_16] : memref<1x128xf32, #tpu.memory_space<vmem>>, vector<1x128xf32>
      %18 = vector.broadcast %17 : vector<1x128xf32> to vector<128x128xf32>
      %19 = arith.addf %16, %18 : vector<128x128xf32>
      %cst_17 = arith.constant 0.000000e+00 : f32
      %20 = vector.broadcast %cst_17 : f32 to vector<128x128xf32>
      %21 = arith.cmpf ogt, %19, %20 : vector<128x128xf32>
      %cst_18 = arith.constant 2.000000e-01 : f32
      %22 = vector.broadcast %cst_18 : f32 to vector<128x128xf32>
      %23 = arith.mulf %22, %19 : vector<128x128xf32>
      %24 = arith.select %21, %19, %23 : vector<128x128xi1>, vector<128x128xf32>
      %c0_19 = arith.constant 0 : index
      %c0_20 = arith.constant 0 : index
      %25 = vector.load %arg6[%c0_19, %c0_20] : memref<128x128xbf16, #tpu.memory_space<vmem>>, vector<128x128xbf16>
      %26 = arith.extf %25 : vector<128x128xbf16> to vector<128x128xf32>
      %cst_21 = arith.constant dense<0.000000e+00> : vector<128x128xf32>
      %27 = tpu.matmul %24, %26, %cst_21 {dimension_numbers = #tpu.dot_dimension_numbers<[1], [0], [0], [1], [0, 0, 1, 1], [], []>} : vector<128x128xf32>, vector<128x128xf32>, vector<128x128xf32> -> vector<128x128xf32>
      %c0_22 = arith.constant 0 : index
      %c0_23 = arith.constant 0 : index
      %28 = vector.load %arg7[%c0_22, %c0_23] : memref<128x128xf32, #tpu.memory_space<vmem>>, vector<128x128xf32>
      tpu.vector_store %arg7[%c0_22, %c0_23], %27 {strides = array<i32>} : memref<128x128xf32, #tpu.memory_space<vmem>>, vector<128x128xf32>,
    } else {
    }
    return
  }
  func.func @transform_0(%arg0: i32, %arg1: i32) -> (i32, i32) {
    %c0_i32 = arith.constant 0 : i32
    return %arg0, %arg1 : i32, i32
  }
  func.func @transform_1(%arg0: i32, %arg1: i32) -> (i32, i32) {
    %c0_i32 = arith.constant 0 : i32
    %c0_i32_0 = arith.constant 0 : i32
    return %arg1, %c0_i32 : i32, i32
  }
  func.func @transform_2(%arg0: i32, %arg1: i32) -> (i32, i32) {
    %c0_i32 = arith.constant 0 : i32
    %c0_i32_0 = arith.constant 0 : i32
    %c0_i32_1 = arith.constant 0 : i32
    return %c0_i32, %c0_i32_0 : i32, i32
  }
  func.func @transform_3(%arg0: i32, %arg1: i32) -> (i32, i32) {
    %c0_i32 = arith.constant 0 : i32
    %c0_i32_0 = arith.constant 0 : i32
    %c0_i32_1 = arith.constant 0 : i32
    return %c0_i32, %c0_i32_0 : i32, i32
  }
  func.func @transform_4(%arg0: i32, %arg1: i32) -> (i32, i32) {
    %c0_i32 = arith.constant 0 : i32
    %c0_i32_0 = arith.constant 0 : i32
    %c0_i32_1 = arith.constant 0 : i32
    return %c0_i32, %c0_i32_0 : i32, i32
  }
  func.func @transform_5(%arg0: i32, %arg1: i32) -> (i32, i32) {
    %c0_i32 = arith.constant 0 : i32
    %c0_i32_0 = arith.constant 0 : i32
    return %arg0, %c0_i32 : i32, i32
  }
}

</mosaic_0001>

<llo_original>
// kernel: edge_gcn_forward.2
$region0: #{edge_gcn_forward.2}
  #allocation0 [shape = 'u32[]', space=smem, size = 0x4, offset = 0x4, fixed_abs, tag = 'smem constant byte address 0x4 - core index']
  #allocation1 [shape = 'u32[144,128]{1,0:T(1,128)}', space=vmem, size = 0x12000, scoped, tag = 'internal scratch']
  %s0 = inlined_call_operand.vmem [shape: bf16[128,128], index: 0, kind: input, shape index: {}]
  %s1 = inlined_call_operand.vmem [shape: bf16[128,128], index: 1, kind: input, shape index: {}]
  %s2 = inlined_call_operand.vmem [shape: f32[1,128], index: 2, kind: input, shape index: {}]
  %s3 = inlined_call_operand.vmem [shape: bf16[128,128], index: 3, kind: input, shape index: {}]
  %s4 = inlined_call_operand.vmem [shape: f32[1,128], index: 4, kind: input, shape index: {}]
  %s5 = inlined_call_operand.vmem [shape: bf16[128,128], index: 5, kind: output, shape index: {}]
  %s6 = sld [smem:[#allocation0]]
  $region30: #{edge_gcn_forward.2} parent=0
    _
  %s8 = ssub.s32 1, %s6
  %s9 = scalar_select 0, %s8, %s6
  // Predicated region
  $region2: #{edge_gcn_forward.2} parent=0 // pred_check
    _
  $region3: #{edge_gcn_forward.2} parent=0 // pred_check_branch
    %11 = sbr.rel (0) target = $region5
  $region4: #{edge_gcn_forward.2} parent=0 // pred_region
    _
  $region5: #{edge_gcn_forward.2} parent=0 // pred_fallthru
    _
  // Predicated region
  $region6: #{edge_gcn_forward.2} parent=0 // pred_check
    _
  $region7: #{edge_gcn_forward.2} parent=0 // pred_check_branch
    %13 = sbr.rel (0) target = $region9
  $region8: #{edge_gcn_forward.2} parent=0 // pred_region
    _
  $region9: #{edge_gcn_forward.2} parent=0 // pred_fallthru
    _
  // Predicated region
  $region10: #{edge_gcn_forward.2} parent=0 // pred_check
    _
  $region11: #{edge_gcn_forward.2} parent=0 // pred_check_branch
    %15 = sbr.rel (0) target = $region13
  $region12: #{edge_gcn_forward.2} parent=0 // pred_region
    _
  $region13: #{edge_gcn_forward.2} parent=0 // pred_fallthru
    _
  // Predicated region
  $region14: #{edge_gcn_forward.2} parent=0 // pred_check
    _
  $region15: #{edge_gcn_forward.2} parent=0 // pred_check_branch
    %17 = sbr.rel (0) target = $region17
  $region16: #{edge_gcn_forward.2} parent=0 // pred_region
    _
  $region17: #{edge_gcn_forward.2} parent=0 // pred_fallthru
    _
  // Predicated region
  $region18: #{edge_gcn_forward.2} parent=0 // pred_check
    _
  $region19: #{edge_gcn_forward.2} parent=0 // pred_check_branch
    %19 = sbr.rel (0) target = $region21
  $region20: #{edge_gcn_forward.2} parent=0 // pred_region
    _
  $region21: #{edge_gcn_forward.2} parent=0 // pred_fallthru
    _
  %v21 = vld [vmem:[%s0] sm:$0xf]
  %v22 = vld [vmem:[%s0 + $0x4] sm:$0xf]
  %v23 = vld [vmem:[%s0 + $0x8] sm:$0xf]
  %v24 = vld [vmem:[%s0 + $0xc] sm:$0xf]
  %v25 = vld [vmem:[%s0 + $0x10] sm:$0xf]
  %v26 = vld [vmem:[%s0 + $0x14] sm:$0xf]
  %v27 = vld [vmem:[%s0 + $0x18] sm:$0xf]
  %v28 = vld [vmem:[%s0 + $0x1c] sm:$0xf]
  %v29 = vld [vmem:[%s0 + $0x20] sm:$0xf]
  %v30 = vld [vmem:[%s0 + $0x24] sm:$0xf]
  %v31 = vld [vmem:[%s0 + $0x28] sm:$0xf]
  %v32 = vld [vmem:[%s0 + $0x2c] sm:$0xf]
  %v33 = vld [vmem:[%s0 + $0x30] sm:$0xf]
  %v34 = vld [vmem:[%s0 + $0x34] sm:$0xf]
  %v35 = vld [vmem:[%s0 + $0x38] sm:$0xf]
  %v36 = vld [vmem:[%s0 + $0x3c] sm:$0xf]
  %v37 = vld [vmem:[%s1] sm:$0xf]
  %v38 = vld [vmem:[%s1 + $0x4] sm:$0xf]
  %v39 = vld [vmem:[%s1 + $0x8] sm:$0xf]
  %v40 = vld [vmem:[%s1 + $0xc] sm:$0xf]
  %v41 = vld [vmem:[%s1 + $0x10] sm:$0xf]
  %v42 = vld [vmem:[%s1 + $0x14] sm:$0xf]
  %v43 = vld [vmem:[%s1 + $0x18] sm:$0xf]
  %v44 = vld [vmem:[%s1 + $0x1c] sm:$0xf]
  %v45 = vld [vmem:[%s1 + $0x20] sm:$0xf]
  %v46 = vld [vmem:[%s1 + $0x24] sm:$0xf]
  %v47 = vld [vmem:[%s1 + $0x28] sm:$0xf]
  %v48 = vld [vmem:[%s1 + $0x2c] sm:$0xf]
  %v49 = vld [vmem:[%s1 + $0x30] sm:$0xf]
  %v50 = vld [vmem:[%s1 + $0x34] sm:$0xf]
  %v51 = vld [vmem:[%s1 + $0x38] sm:$0xf]
  %v52 = vld [vmem:[%s1 + $0x3c] sm:$0xf]
  %v53 = vld [vmem:[%s2] sm:$0x1]
  %v55 = vlaneseq
  %v56 = vshrl.u32 %v55, 7
  %v57 = vsub.s32 0, %v56
  %v58 = vrot.slane %v53, %v57
  %v76 = vunpack.c.l.b16 %v21
  %v77 = vunpack.c.l.b16 %v22
  %v78 = vunpack.c.l.b16 %v23
  %v79 = vunpack.c.l.b16 %v24
  %v80 = vunpack.c.l.b16 %v25
  %v81 = vunpack.c.l.b16 %v26
  %v82 = vunpack.c.l.b16 %v27
  %v83 = vunpack.c.l.b16 %v28
  %v84 = vunpack.c.l.b16 %v29
  %v85 = vunpack.c.l.b16 %v30
  %v86 = vunpack.c.l.b16 %v31
  %v87 = vunpack.c.l.b16 %v32
  %v88 = vunpack.c.l.b16 %v33
  %v89 = vunpack.c.l.b16 %v34
  %v90 = vunpack.c.l.b16 %v35
  %v91 = vunpack.c.l.b16 %v36
  %v92 = vpack.c.b16 %v77, %v76
  %v93 = vpack.c.b16 %v79, %v78
  %v94 = vpack.c.b16 %v81, %v80
  %v95 = vpack.c.b16 %v83, %v82
  %v96 = vpack.c.b16 %v85, %v84
  %v97 = vpack.c.b16 %v87, %v86
  %v98 = vpack.c.b16 %v89, %v88
  %v99 = vpack.c.b16 %v91, %v90
  %v124 = vunpack.c.l.b16 %v37
  %v125 = vunpack.c.l.b16 %v38
  %v126 = vunpack.c.l.b16 %v39
  %v127 = vunpack.c.l.b16 %v40
  %v128 = vunpack.c.l.b16 %v41
  %v129 = vunpack.c.l.b16 %v42
  %v130 = vunpack.c.l.b16 %v43
  %v131 = vunpack.c.l.b16 %v44
  %v132 = vunpack.c.l.b16 %v45
  %v133 = vunpack.c.l.b16 %v46
  %v134 = vunpack.c.l.b16 %v47
  %v135 = vunpack.c.l.b16 %v48
  %v136 = vunpack.c.l.b16 %v49
  %v137 = vunpack.c.l.b16 %v50
  %v138 = vunpack.c.l.b16 %v51
  %v139 = vunpack.c.l.b16 %v52
  %v140 = vpack.c.b16 %v125, %v124
  %v141 = vpack.c.b16 %v127, %v126
  %v142 = vpack.c.b16 %v129, %v128
  %v143 = vpack.c.b16 %v131, %v130
  %v144 = vpack.c.b16 %v133, %v132
  %v145 = vpack.c.b16 %v135, %v134
  %v146 = vpack.c.b16 %v137, %v136
  %v147 = vpack.c.b16 %v139, %v138
  %156 = vmatprep.subr.bf16.mxu0 0
  %157 = vmatpush1.bf16.msra.mxu0 %v140
  %158 = vmatprep.subr.bf16.mxu0 0
  %159 = vmatpush1.bf16.msra.mxu0 %v141
  %160 = vmatprep.subr.bf16.mxu0 0
  %161 = vmatpush1.bf16.msra.mxu0 %v142
  %162 = vmatprep.subr.bf16.mxu0 0
  %163 = vmatpush1.bf16.msra.mxu0 %v143
  %164 = vmatprep.subr.bf16.mxu0 0
  %165 = vmatpush1.bf16.msra.mxu0 %v144
  %166 = vmatprep.subr.bf16.mxu0 0
  %167 = vmatpush1.bf16.msra.mxu0 %v145
  %168 = vmatprep.subr.bf16.mxu0 0
  %169 = vmatpush1.bf16.msra.mxu0 %v146
  %170 = vmatprep.subr.bf16.mxu0 0
  %171 = vmatpush1.bf16.msra.mxu0 %v147
  %172 = vmatprep.subr.bf16.mxu0 0
  %173 = vmatpush1.bf16.msra.mxu0 0
  %174 = vmatprep.subr.bf16.mxu0 0
  %175 = vmatpush1.bf16.msra.mxu0 0
  %176 = vmatprep.subr.bf16.mxu0 0
  %177 = vmatpush1.bf16.msra.mxu0 0
  %178 = vmatprep.subr.bf16.mxu0 0
  %179 = vmatpush1.bf16.msra.mxu0 0
  %180 = vmatprep.subr.bf16.mxu0 0
  %181 = vmatpush1.bf16.msra.mxu0 0
  %182 = vmatprep.subr.bf16.mxu0 0
  %183 = vmatpush1.bf16.msra.mxu0 0
  %184 = vmatprep.subr.bf16.mxu0 0
  %185 = vmatpush1.bf16.msra.mxu0 0
  %186 = vmatprep.subr.bf16.mxu0 0
  %187 = vmatpush1.bf16.msra.mxu0 0
  %188 = vmatprep.mubr.bf16.mxu0 0
  %189 = vmatmul.mubr.bf16.gmra.mrb[0].mxu0 %v92
  %v190 = vpop.f32.mrb[0].mxu0
  %v191 = vadd.f32 %v58, %v190
  %v192 = vpop.f32.mrb[0].mxu0
  %v193 = vpop.f32.mrb[0].mxu0
  %v194 = vadd.f32 %v58, %v193
  %v195 = vpop.f32.mrb[0].mxu0
  %196 = vmatprep.mubr.bf16.mxu0 0
  %197 = vmatmul.mubr.bf16.gmra.mrb[0].mxu0 %v93
  %v198 = vpop.f32.mrb[0].mxu0
  %v199 = vadd.f32 %v58, %v198
  %v200 = vpop.f32.mrb[0].mxu0
  %v201 = vpop.f32.mrb[0].mxu0
  %v202 = vadd.f32 %v58, %v201
  %v203 = vpop.f32.mrb[0].mxu0
  %204 = vmatprep.mubr.bf16.mxu0 0
  %205 = vmatmul.mubr.bf16.gmra.mrb[0].mxu0 %v94
  %v206 = vpop.f32.mrb[0].mxu0
  %v207 = vadd.f32 %v58, %v206
  %v208 = vpop.f32.mrb[0].mxu0
  %v209 = vpop.f32.mrb[0].mxu0
  %v210 = vadd.f32 %v58, %v209
  %v211 = vpop.f32.mrb[0].mxu0
  %212 = vmatprep.mubr.bf16.mxu0 0
  %213 = vmatmul.mubr.bf16.gmra.mrb[0].mxu0 %v95
  %v214 = vpop.f32.mrb[0].mxu0
  %v215 = vadd.f32 %v58, %v214
  %v216 = vpop.f32.mrb[0].mxu0
  %v217 = vpop.f32.mrb[0].mxu0
  %v218 = vadd.f32 %v58, %v217
  %v219 = vpop.f32.mrb[0].mxu0
  %220 = vmatprep.mubr.bf16.mxu0 0
  %221 = vmatmul.mubr.bf16.gmra.mrb[0].mxu0 %v96
  %v222 = vpop.f32.mrb[0].mxu0
  %v223 = vadd.f32 %v58, %v222
  %v224 = vpop.f32.mrb[0].mxu0
  %v225 = vpop.f32.mrb[0].mxu0
  %v226 = vadd.f32 %v58, %v225
  %v227 = vpop.f32.mrb[0].mxu0
  %228 = vmatprep.mubr.bf16.mxu0 0
  %229 = vmatmul.mubr.bf16.gmra.mrb[0].mxu0 %v97
  %v230 = vpop.f32.mrb[0].mxu0
  %v231 = vadd.f32 %v58, %v230
  %v232 = vpop.f32.mrb[0].mxu0
  %v233 = vpop.f32.mrb[0].mxu0
  %v234 = vadd.f32 %v58, %v233
  %v235 = vpop.f32.mrb[0].mxu0
  %236 = vmatprep.mubr.bf16.mxu0 0
  %237 = vmatmul.mubr.bf16.gmra.mrb[0].mxu0 %v98
  %v238 = vpop.f32.mrb[0].mxu0
  %v239 = vadd.f32 %v58, %v238
  %v240 = vpop.f32.mrb[0].mxu0
  %v241 = vpop.f32.mrb[0].mxu0
  %v242 = vadd.f32 %v58, %v241
  %v243 = vpop.f32.mrb[0].mxu0
  %244 = vmatprep.mubr.bf16.mxu0 0
  %245 = vmatmul.mubr.bf16.gmra.mrb[0].mxu0 %v99
  %v246 = vpop.f32.mrb[0].mxu0
  %v247 = vadd.f32 %v58, %v246
  %v248 = vpop.f32.mrb[0].mxu0
  %v249 = vpop.f32.mrb[0].mxu0
  %v250 = vadd.f32 %v58, %v249
  %v251 = vpop.f32.mrb[0].mxu0
  %252 = vdwg.mxu0
  %v253 = vmax.f32 %v191, 0.0
  %v254 = vmax.f32 %v194, 0.0
  %v255 = vmax.f32 %v199, 0.0
  %v256 = vmax.f32 %v202, 0.0
  %v257 = vmax.f32 %v207, 0.0
  %v258 = vmax.f32 %v210, 0.0
  %v259 = vmax.f32 %v215, 0.0
  %v260 = vmax.f32 %v218, 0.0
  %v261 = vmax.f32 %v223, 0.0
  %v262 = vmax.f32 %v226, 0.0
  %v263 = vmax.f32 %v231, 0.0
  %v264 = vmax.f32 %v234, 0.0
  %v265 = vmax.f32 %v239, 0.0
  %v266 = vmax.f32 %v242, 0.0
  %v267 = vmax.f32 %v247, 0.0
  %v268 = vmax.f32 %v250, 0.0
  %v269 = vpack.c.bf16 %v254, %v253
  %v270 = vpack.c.bf16 %v256, %v255
  %v271 = vpack.c.bf16 %v258, %v257
  %v272 = vpack.c.bf16 %v260, %v259
  %v273 = vpack.c.bf16 %v262, %v261
  %v274 = vpack.c.bf16 %v264, %v263
  %v275 = vpack.c.bf16 %v266, %v265
  %v276 = vpack.c.bf16 %v268, %v267
  %v277 = vld [vmem:[%s3] sm:$0xf]
  %v278 = vld [vmem:[%s3 + $0x4] sm:$0xf]
  %v279 = vld [vmem:[%s3 + $0x8] sm:$0xf]
  %v280 = vld [vmem:[%s3 + $0xc] sm:$0xf]
  %v281 = vld [vmem:[%s3 + $0x10] sm:$0xf]
  %v282 = vld [vmem:[%s3 + $0x14] sm:$0xf]
  %v283 = vld [vmem:[%s3 + $0x18] sm:$0xf]
  %v284 = vld [vmem:[%s3 + $0x1c] sm:$0xf]
  %v285 = vld [vmem:[%s3 + $0x20] sm:$0xf]
  %v286 = vld [vmem:[%s3 + $0x24] sm:$0xf]
  %v287 = vld [vmem:[%s3 + $0x28] sm:$0xf]
  %v288 = vld [vmem:[%s3 + $0x2c] sm:$0xf]
  %v289 = vld [vmem:[%s3 + $0x30] sm:$0xf]
  %v290 = vld [vmem:[%s3 + $0x34] sm:$0xf]
  %v291 = vld [vmem:[%s3 + $0x38] sm:$0xf]
  %v292 = vld [vmem:[%s3 + $0x3c] sm:$0xf]
  %v293 = vld [vmem:[%s4] sm:$0x1]
  %v295 = vlaneseq
  %v296 = vshrl.u32 %v295, 7
  %v297 = vsub.s32 0, %v296
  %v298 = vrot.slane %v293, %v297
  %v316 = vunpack.c.l.b16 %v277
  %v317 = vunpack.c.l.b16 %v278
  %v318 = vunpack.c.l.b16 %v279
  %v319 = vunpack.c.l.b16 %v280
  %v320 = vunpack.c.l.b16 %v281
  %v321 = vunpack.c.l.b16 %v282
  %v322 = vunpack.c.l.b16 %v283
  %v323 = vunpack.c.l.b16 %v284
  %v324 = vunpack.c.l.b16 %v285
  %v325 = vunpack.c.l.b16 %v286
  %v326 = vunpack.c.l.b16 %v287
  %v327 = vunpack.c.l.b16 %v288
  %v328 = vunpack.c.l.b16 %v289
  %v329 = vunpack.c.l.b16 %v290
  %v330 = vunpack.c.l.b16 %v291
  %v331 = vunpack.c.l.b16 %v292
  %v332 = vpack.c.b16 %v317, %v316
  %v333 = vpack.c.b16 %v319, %v318
  %v334 = vpack.c.b16 %v321, %v320
  %v335 = vpack.c.b16 %v323, %v322
  %v336 = vpack.c.b16 %v325, %v324
  %v337 = vpack.c.b16 %v327, %v326
  %v338 = vpack.c.b16 %v329, %v328
  %v339 = vpack.c.b16 %v331, %v330
  %348 = vmatprep.subr.bf16.mxu0 0
  %349 = vmatpush1.bf16.msra.mxu0 %v332
  %350 = vmatprep.subr.bf16.mxu0 0
  %351 = vmatpush1.bf16.msra.mxu0 %v333
  %352 = vmatprep.subr.bf16.mxu0 0
  %353 = vmatpush1.bf16.msra.mxu0 %v334
  %354 = vmatprep.subr.bf16.mxu0 0
  %355 = vmatpush1.bf16.msra.mxu0 %v335
  %356 = vmatprep.subr.bf16.mxu0 0
  %357 = vmatpush1.bf16.msra.mxu0 %v336
  %358 = vmatprep.subr.bf16.mxu0 0
  %359 = vmatpush1.bf16.msra.mxu0 %v337
  %360 = vmatprep.subr.bf16.mxu0 0
  %361 = vmatpush1.bf16.msra.mxu0 %v338
  %362 = vmatprep.subr.bf16.mxu0 0
  %363 = vmatpush1.bf16.msra.mxu0 %v339
  %364 = vmatprep.subr.bf16.mxu0 0
  %365 = vmatpush1.bf16.msra.mxu0 0
  %366 = vmatprep.subr.bf16.mxu0 0
  %367 = vmatpush1.bf16.msra.mxu0 0
  %368 = vmatprep.subr.bf16.mxu0 0
  %369 = vmatpush1.bf16.msra.mxu0 0
  %370 = vmatprep.subr.bf16.mxu0 0
  %371 = vmatpush1.bf16.msra.mxu0 0
  %372 = vmatprep.subr.bf16.mxu0 0
  %373 = vmatpush1.bf16.msra.mxu0 0
  %374 = vmatprep.subr.bf16.mxu0 0
  %375 = vmatpush1.bf16.msra.mxu0 0
  %376 = vmatprep.subr.bf16.mxu0 0
  %377 = vmatpush1.bf16.msra.mxu0 0
  %378 = vmatprep.subr.bf16.mxu0 0
  %379 = vmatpush1.bf16.msra.mxu0 0
  %380 = vmatprep.mubr.bf16.mxu0 0
  %381 = vmatmul.mubr.bf16.gmra.mrb[0].mxu0 %v269
  %v382 = vpop.f32.mrb[0].mxu0
  %v383 = vadd.f32 %v298, %v382
  %v384 = vpop.f32.mrb[0].mxu0
  %v385 = vpop.f32.mrb[0].mxu0
  %v386 = vadd.f32 %v298, %v385
  %v387 = vpop.f32.mrb[0].mxu0
  %388 = vmatprep.mubr.bf16.mxu0 0
  %389 = vmatmul.mubr.bf16.gmra.mrb[0].mxu0 %v270
  %v390 = vpop.f32.mrb[0].mxu0
  %v391 = vadd.f32 %v298, %v390
  %v392 = vpop.f32.mrb[0].mxu0
  %v393 = vpop.f32.mrb[0].mxu0
  %v394 = vadd.f32 %v298, %v393
  %v395 = vpop.f32.mrb[0].mxu0
  %396 = vmatprep.mubr.bf16.mxu0 0
  %397 = vmatmul.mubr.bf16.gmra.mrb[0].mxu0 %v271
  %v398 = vpop.f32.mrb[0].mxu0
  %v399 = vadd.f32 %v298, %v398
  %v400 = vpop.f32.mrb[0].mxu0
  %v401 = vpop.f32.mrb[0].mxu0
  %v402 = vadd.f32 %v298, %v401
  %v403 = vpop.f32.mrb[0].mxu0
  %404 = vmatprep.mubr.bf16.mxu0 0
  %405 = vmatmul.mubr.bf16.gmra.mrb[0].mxu0 %v272
  %v406 = vpop.f32.mrb[0].mxu0
  %v407 = vadd.f32 %v298, %v406
  %v408 = vpop.f32.mrb[0].mxu0
  %v409 = vpop.f32.mrb[0].mxu0
  %v410 = vadd.f32 %v298, %v409
  %v411 = vpop.f32.mrb[0].mxu0
  %412 = vmatprep.mubr.bf16.mxu0 0
  %413 = vmatmul.mubr.bf16.gmra.mrb[0].mxu0 %v273
  %v414 = vpop.f32.mrb[0].mxu0
  %v415 = vadd.f32 %v298, %v414
  %v416 = vpop.f32.mrb[0].mxu0
  %v417 = vpop.f32.mrb[0].mxu0
  %v418 = vadd.f32 %v298, %v417
  %v419 = vpop.f32.mrb[0].mxu0
  %420 = vmatprep.mubr.bf16.mxu0 0
  %421 = vmatmul.mubr.bf16.gmra.mrb[0].mxu0 %v274
  %v422 = vpop.f32.mrb[0].mxu0
  %v423 = vadd.f32 %v298, %v422
  %v424 = vpop.f32.mrb[0].mxu0
  %v425 = vpop.f32.mrb[0].mxu0
  %v426 = vadd.f32 %v298, %v425
  %v427 = vpop.f32.mrb[0].mxu0
  %428 = vmatprep.mubr.bf16.mxu0 0
  %429 = vmatmul.mubr.bf16.gmra.mrb[0].mxu0 %v275
  %v430 = vpop.f32.mrb[0].mxu0
  %v431 = vadd.f32 %v298, %v430
  %v432 = vpop.f32.mrb[0].mxu0
  %v433 = vpop.f32.mrb[0].mxu0
  %v434 = vadd.f32 %v298, %v433
  %v435 = vpop.f32.mrb[0].mxu0
  %436 = vmatprep.mubr.bf16.mxu0 0
  %437 = vmatmul.mubr.bf16.gmra.mrb[0].mxu0 %v276
  %v438 = vpop.f32.mrb[0].mxu0
  %v439 = vadd.f32 %v298, %v438
  %v440 = vpop.f32.mrb[0].mxu0
  %v441 = vpop.f32.mrb[0].mxu0
  %v442 = vadd.f32 %v298, %v441
  %v443 = vpop.f32.mrb[0].mxu0
  %444 = vdwg.mxu0
  %v445 = vpack.c.bf16 %v386, %v383
  %v446 = vpack.c.bf16 %v394, %v391
  %v447 = vpack.c.bf16 %v402, %v399
  %v448 = vpack.c.bf16 %v410, %v407
  %v449 = vpack.c.bf16 %v418, %v415
  %v450 = vpack.c.bf16 %v426, %v423
  %v451 = vpack.c.bf16 %v434, %v431
  %v452 = vpack.c.bf16 %v442, %v439
  %v461 = vunpack.c.l.b16 %v445
  %v462 = vunpack.c.h.b16 %v445
  %v463 = vunpack.c.l.b16 %v446
  %v464 = vunpack.c.h.b16 %v446
  %v465 = vunpack.c.l.b16 %v447
  %v466 = vunpack.c.h.b16 %v447
  %v467 = vunpack.c.l.b16 %v448
  %v468 = vunpack.c.h.b16 %v448
  %v469 = vunpack.c.l.b16 %v449
  %v470 = vunpack.c.h.b16 %v449
  %v471 = vunpack.c.l.b16 %v450
  %v472 = vunpack.c.h.b16 %v450
  %v473 = vunpack.c.l.b16 %v451
  %v474 = vunpack.c.h.b16 %v451
  %v475 = vunpack.c.l.b16 %v452
  %v476 = vunpack.c.h.b16 %v452
  %v477 = vpack.c.b16 %v461, %v461
  %v478 = vpack.c.b16 %v462, %v462
  %v479 = vpack.c.b16 %v463, %v463
  %v480 = vpack.c.b16 %v464, %v464
  %v481 = vpack.c.b16 %v465, %v465
  %v482 = vpack.c.b16 %v466, %v466
  %v483 = vpack.c.b16 %v467, %v467
  %v484 = vpack.c.b16 %v468, %v468
  %v485 = vpack.c.b16 %v469, %v469
  %v486 = vpack.c.b16 %v470, %v470
  %v487 = vpack.c.b16 %v471, %v471
  %v488 = vpack.c.b16 %v472, %v472
  %v489 = vpack.c.b16 %v473, %v473
  %v490 = vpack.c.b16 %v474, %v474
  %v491 = vpack.c.b16 %v475, %v475
  %v492 = vpack.c.b16 %v476, %v476
  %509 = vst [vmem:[%s5] sm:$0xf] %v477
  %510 = vst [vmem:[%s5 + $0x4] sm:$0xf] %v478
  %511 = vst [vmem:[%s5 + $0x8] sm:$0xf] %v479
  %512 = vst [vmem:[%s5 + $0xc] sm:$0xf] %v480
  %513 = vst [vmem:[%s5 + $0x10] sm:$0xf] %v481
  %514 = vst [vmem:[%s5 + $0x14] sm:$0xf] %v482
  %515 = vst [vmem:[%s5 + $0x18] sm:$0xf] %v483
  %516 = vst [vmem:[%s5 + $0x1c] sm:$0xf] %v484
  %517 = vst [vmem:[%s5 + $0x20] sm:$0xf] %v485
  %518 = vst [vmem:[%s5 + $0x24] sm:$0xf] %v486
  %519 = vst [vmem:[%s5 + $0x28] sm:$0xf] %v487
  %520 = vst [vmem:[%s5 + $0x2c] sm:$0xf] %v488
  %521 = vst [vmem:[%s5 + $0x30] sm:$0xf] %v489
  %522 = vst [vmem:[%s5 + $0x34] sm:$0xf] %v490
  %523 = vst [vmem:[%s5 + $0x38] sm:$0xf] %v491
  %524 = vst [vmem:[%s5 + $0x3c] sm:$0xf] %v492
  // Predicated region
  $region22: #{edge_gcn_forward.2} parent=0 // pred_check
    _
  $region23: #{edge_gcn_forward.2} parent=0 // pred_check_branch
    %526 = sbr.rel (0) target = $region25
  $region24: #{edge_gcn_forward.2} parent=0 // pred_region
    _
  $region25: #{edge_gcn_forward.2} parent=0 // pred_fallthru
    _
  // Predicated region
  $region26: #{edge_gcn_forward.2} parent=0 // pred_check
    _
  $region27: #{edge_gcn_forward.2} parent=0 // pred_check_branch
    %528 = sbr.rel (0) target = $region29
  $region28: #{edge_gcn_forward.2} parent=0 // pred_region
    _
  $region29: #{edge_gcn_forward.2} parent=0 // pred_fallthru
    _

// kernel: edge_gcn_forward.3
$region0: #{edge_gcn_forward.3}
  #allocation0 [shape = 'u32[]', space=smem, size = 0x4, offset = 0x4, fixed_abs, tag = 'smem constant byte address 0x4 - core index']
  #allocation1 [shape = 'u32[144,128]{1,0:T(1,128)}', space=vmem, size = 0x12000, scoped, tag = 'internal scratch']
  #allocation2 [shape = 'f32[128,128]{1,0:T(8,128)}', space=vmem, size = 0x10000, scoped, tag = 'scratch operand']
  %s0 = inlined_call_operand.vmem [shape: s8[128,128], index: 0, kind: input, shape index: {}]
  %s1 = inlined_call_operand.vmem [shape: bf16[128,128], index: 1, kind: input, shape index: {}]
  %s2 = inlined_call_operand.vmem [shape: bf16[128,128], index: 2, kind: input, shape index: {}]
  %s3 = inlined_call_operand.vmem [shape: f32[1,128], index: 3, kind: input, shape index: {}]
  %s4 = inlined_call_operand.vmem [shape: bf16[128,128], index: 4, kind: input, shape index: {}]
  %s5 = inlined_call_operand.vmem [shape: f32[128,128], index: 5, kind: output, shape index: {}]
  %s6 = sld [smem:[#allocation0]]
  $region38: #{edge_gcn_forward.3} parent=0
    _
  %s8 = ssub.s32 1, %s6
  %s9 = scalar_select 0, %s8, %s6
  // Predicated region
  $region2: #{edge_gcn_forward.3} parent=0 // pred_check
    _
  $region3: #{edge_gcn_forward.3} parent=0 // pred_check_branch
    %11 = sbr.rel (0) target = $region5
  $region4: #{edge_gcn_forward.3} parent=0 // pred_region
    _
  $region5: #{edge_gcn_forward.3} parent=0 // pred_fallthru
    _
  // Predicated region
  $region6: #{edge_gcn_forward.3} parent=0 // pred_check
    _
  $region7: #{edge_gcn_forward.3} parent=0 // pred_check_branch
    %13 = sbr.rel (0) target = $region9
  $region8: #{edge_gcn_forward.3} parent=0 // pred_region
    _
  $region9: #{edge_gcn_forward.3} parent=0 // pred_fallthru
    _
  // Predicated region
  $region10: #{edge_gcn_forward.3} parent=0 // pred_check
    _
  $region11: #{edge_gcn_forward.3} parent=0 // pred_check_branch
    %15 = sbr.rel (0) target = $region13
  $region12: #{edge_gcn_forward.3} parent=0 // pred_region
    _
  $region13: #{edge_gcn_forward.3} parent=0 // pred_fallthru
    _
  // Predicated region
  $region14: #{edge_gcn_forward.3} parent=0 // pred_check
    _
  $region15: #{edge_gcn_forward.3} parent=0 // pred_check_branch
    %17 = sbr.rel (0) target = $region17
  $region16: #{edge_gcn_forward.3} parent=0 // pred_region
    _
  $region17: #{edge_gcn_forward.3} parent=0 // pred_fallthru
    _
  // Predicated region
  $region18: #{edge_gcn_forward.3} parent=0 // pred_check
    _
  $region19: #{edge_gcn_forward.3} parent=0 // pred_check_branch
    %19 = sbr.rel (0) target = $region21
  $region20: #{edge_gcn_forward.3} parent=0 // pred_region
    _
  $region21: #{edge_gcn_forward.3} parent=0 // pred_fallthru
    _
  %p21 = scmp.eq.s32.totalorder 0, 0
  // Predicated region
  $region22: #{edge_gcn_forward.3} parent=0 // pred_check
    %p22 = pneg %p21
  $region23: #{edge_gcn_forward.3} parent=0 // pred_check_branch
    %24 = sbr.rel (%p22) target = $region25
  $region24: #{edge_gcn_forward.3} parent=0 // pred_region
    %25 = vst [vmem:[#allocation2] sm:$0xff] 0.0
    %26 = vst [vmem:[#allocation2 + $0x8] sm:$0xff] 0.0
    %27 = vst [vmem:[#allocation2 + $0x10] sm:$0xff] 0.0
    %28 = vst [vmem:[#allocation2 + $0x18] sm:$0xff] 0.0
    %29 = vst [vmem:[#allocation2 + $0x20] sm:$0xff] 0.0
    %30 = vst [vmem:[#allocation2 + $0x28] sm:$0xff] 0.0
    %31 = vst [vmem:[#allocation2 + $0x30] sm:$0xff] 0.0
    %32 = vst [vmem:[#allocation2 + $0x38] sm:$0xff] 0.0
    %33 = vst [vmem:[#allocation2 + $0x40] sm:$0xff] 0.0
    %34 = vst [vmem:[#allocation2 + $0x48] sm:$0xff] 0.0
    %35 = vst [vmem:[#allocation2 + $0x50] sm:$0xff] 0.0
    %36 = vst [vmem:[#allocation2 + $0x58] sm:$0xff] 0.0
    %37 = vst [vmem:[#allocation2 + $0x60] sm:$0xff] 0.0
    %38 = vst [vmem:[#allocation2 + $0x68] sm:$0xff] 0.0
    %39 = vst [vmem:[#allocation2 + $0x70] sm:$0xff] 0.0
    %40 = vst [vmem:[#allocation2 + $0x78] sm:$0xff] 0.0
  $region25: #{edge_gcn_forward.3} parent=0 // pred_fallthru
    _
  %v41 = vld [vmem:[#allocation2] sm:$0xff]
  %v42 = vld [vmem:[#allocation2 + $0x8] sm:$0xff]
  %v43 = vld [vmem:[#allocation2 + $0x10] sm:$0xff]
  %v44 = vld [vmem:[#allocation2 + $0x18] sm:$0xff]
  %v45 = vld [vmem:[#allocation2 + $0x20] sm:$0xff]
  %v46 = vld [vmem:[#allocation2 + $0x28] sm:$0xff]
  %v47 = vld [vmem:[#allocation2 + $0x30] sm:$0xff]
  %v48 = vld [vmem:[#allocation2 + $0x38] sm:$0xff]
  %v49 = vld [vmem:[#allocation2 + $0x40] sm:$0xff]
  %v50 = vld [vmem:[#allocation2 + $0x48] sm:$0xff]
  %v51 = vld [vmem:[#allocation2 + $0x50] sm:$0xff]
  %v52 = vld [vmem:[#allocation2 + $0x58] sm:$0xff]
  %v53 = vld [vmem:[#allocation2 + $0x60] sm:$0xff]
  %v54 = vld [vmem:[#allocation2 + $0x68] sm:$0xff]
  %v55 = vld [vmem:[#allocation2 + $0x70] sm:$0xff]
  %v56 = vld [vmem:[#allocation2 + $0x78] sm:$0xff]
  %v57 = vld [vmem:[%s0] sm:$0xff]
  %v58 = vld [vmem:[%s0 + $0x8] sm:$0xff]
  %v59 = vld [vmem:[%s0 + $0x10] sm:$0xff]
  %v60 = vld [vmem:[%s0 + $0x18] sm:$0xff]
  %v61 = vunpack.c.l.s8.bf16 %v57
  %v62 = vunpack.c.h.s8.bf16 %v57
  %v63 = vunpack.c.l.s8.bf16 %v58
  %v64 = vunpack.c.h.s8.bf16 %v58
  %v65 = vunpack.c.l.s8.bf16 %v59
  %v66 = vunpack.c.h.s8.bf16 %v59
  %v67 = vunpack.c.l.s8.bf16 %v60
  %v68 = vunpack.c.h.s8.bf16 %v60
  %v69 = vld [vmem:[%s1] sm:$0xf]
  %v70 = vld [vmem:[%s1 + $0x4] sm:$0xf]
  %v71 = vld [vmem:[%s1 + $0x8] sm:$0xf]
  %v72 = vld [vmem:[%s1 + $0xc] sm:$0xf]
  %v73 = vld [vmem:[%s1 + $0x10] sm:$0xf]
  %v74 = vld [vmem:[%s1 + $0x14] sm:$0xf]
  %v75 = vld [vmem:[%s1 + $0x18] sm:$0xf]
  %v76 = vld [vmem:[%s1 + $0x1c] sm:$0xf]
  %v77 = vld [vmem:[%s1 + $0x20] sm:$0xf]
  %v78 = vld [vmem:[%s1 + $0x24] sm:$0xf]
  %v79 = vld [vmem:[%s1 + $0x28] sm:$0xf]
  %v80 = vld [vmem:[%s1 + $0x2c] sm:$0xf]
  %v81 = vld [vmem:[%s1 + $0x30] sm:$0xf]
  %v82 = vld [vmem:[%s1 + $0x34] sm:$0xf]
  %v83 = vld [vmem:[%s1 + $0x38] sm:$0xf]
  %v84 = vld [vmem:[%s1 + $0x3c] sm:$0xf]
  %v101 = vunpack.c.l.b16 %v69
  %v102 = vunpack.c.l.b16 %v70
  %v103 = vunpack.c.l.b16 %v71
  %v104 = vunpack.c.l.b16 %v72
  %v105 = vunpack.c.l.b16 %v73
  %v106 = vunpack.c.l.b16 %v74
  %v107 = vunpack.c.l.b16 %v75
  %v108 = vunpack.c.l.b16 %v76
  %v109 = vunpack.c.l.b16 %v77
  %v110 = vunpack.c.l.b16 %v78
  %v111 = vunpack.c.l.b16 %v79
  %v112 = vunpack.c.l.b16 %v80
  %v113 = vunpack.c.l.b16 %v81
  %v114 = vunpack.c.l.b16 %v82
  %v115 = vunpack.c.l.b16 %v83
  %v116 = vunpack.c.l.b16 %v84
  %v117 = vpack.c.b16 %v102, %v101
  %v118 = vpack.c.b16 %v104, %v103
  %v119 = vpack.c.b16 %v106, %v105
  %v120 = vpack.c.b16 %v108, %v107
  %v121 = vpack.c.b16 %v110, %v109
  %v122 = vpack.c.b16 %v112, %v111
  %v123 = vpack.c.b16 %v114, %v113
  %v124 = vpack.c.b16 %v116, %v115
  %133 = vmatprep.subr.bf16.mxu0 0
  %134 = vmatpush1.bf16.msra.mxu0 %v117
  %135 = vmatprep.subr.bf16.mxu0 0
  %136 = vmatpush1.bf16.msra.mxu0 %v118
  %137 = vmatprep.subr.bf16.mxu0 0
  %138 = vmatpush1.bf16.msra.mxu0 %v119
  %139 = vmatprep.subr.bf16.mxu0 0
  %140 = vmatpush1.bf16.msra.mxu0 %v120
  %141 = vmatprep.subr.bf16.mxu0 0
  %142 = vmatpush1.bf16.msra.mxu0 %v121
  %143 = vmatprep.subr.bf16.mxu0 0
  %144 = vmatpush1.bf16.msra.mxu0 %v122
  %145 = vmatprep.subr.bf16.mxu0 0
  %146 = vmatpush1.bf16.msra.mxu0 %v123
  %147 = vmatprep.subr.bf16.mxu0 0
  %148 = vmatpush1.bf16.msra.mxu0 %v124
  %149 = vmatprep.subr.bf16.mxu0 0
  %150 = vmatpush1.bf16.msra.mxu0 0
  %151 = vmatprep.subr.bf16.mxu0 0
  %152 = vmatpush1.bf16.msra.mxu0 0
  %153 = vmatprep.subr.bf16.mxu0 0
  %154 = vmatpush1.bf16.msra.mxu0 0
  %155 = vmatprep.subr.bf16.mxu0 0
  %156 = vmatpush1.bf16.msra.mxu0 0
  %157 = vmatprep.subr.bf16.mxu0 0
  %158 = vmatpush1.bf16.msra.mxu0 0
  %159 = vmatprep.subr.bf16.mxu0 0
  %160 = vmatpush1.bf16.msra.mxu0 0
  %161 = vmatprep.subr.bf16.mxu0 0
  %162 = vmatpush1.bf16.msra.mxu0 0
  %163 = vmatprep.subr.bf16.mxu0 0
  %164 = vmatpush1.bf16.msra.mxu0 0
  %165 = vmatprep.mubr.bf16.mxu0 0
  %166 = vmatmul.mubr.bf16.gmra.mrb[0].mxu0 %v61
  %v167 = vpop.f32.mrb[0].mxu0
  %v168 = vadd.f32 0.0, %v167
  %v169 = vpop.f32.mrb[0].mxu0
  %v170 = vpop.f32.mrb[0].mxu0
  %v171 = vadd.f32 0.0, %v170
  %v172 = vpop.f32.mrb[0].mxu0
  %173 = vmatprep.mubr.bf16.mxu0 0
  %174 = vmatmul.mubr.bf16.gmra.mrb[0].mxu0 %v62
  %v175 = vpop.f32.mrb[0].mxu0
  %v176 = vadd.f32 0.0, %v175
  %v177 = vpop.f32.mrb[0].mxu0
  %v178 = vpop.f32.mrb[0].mxu0
  %v179 = vadd.f32 0.0, %v178
  %v180 = vpop.f32.mrb[0].mxu0
  %181 = vmatprep.mubr.bf16.mxu0 0
  %182 = vmatmul.mubr.bf16.gmra.mrb[0].mxu0 %v63
  %v183 = vpop.f32.mrb[0].mxu0
  %v184 = vadd.f32 0.0, %v183
  %v185 = vpop.f32.mrb[0].mxu0
  %v186 = vpop.f32.mrb[0].mxu0
  %v187 = vadd.f32 0.0, %v186
  %v188 = vpop.f32.mrb[0].mxu0
  %189 = vmatprep.mubr.bf16.mxu0 0
  %190 = vmatmul.mubr.bf16.gmra.mrb[0].mxu0 %v64
  %v191 = vpop.f32.mrb[0].mxu0
  %v192 = vadd.f32 0.0, %v191
  %v193 = vpop.f32.mrb[0].mxu0
  %v194 = vpop.f32.mrb[0].mxu0
  %v195 = vadd.f32 0.0, %v194
  %v196 = vpop.f32.mrb[0].mxu0
  %197 = vmatprep.mubr.bf16.mxu0 0
  %198 = vmatmul.mubr.bf16.gmra.mrb[0].mxu0 %v65
  %v199 = vpop.f32.mrb[0].mxu0
  %v200 = vadd.f32 0.0, %v199
  %v201 = vpop.f32.mrb[0].mxu0
  %v202 = vpop.f32.mrb[0].mxu0
  %v203 = vadd.f32 0.0, %v202
  %v204 = vpop.f32.mrb[0].mxu0
  %205 = vmatprep.mubr.bf16.mxu0 0
  %206 = vmatmul.mubr.bf16.gmra.mrb[0].mxu0 %v66
  %v207 = vpop.f32.mrb[0].mxu0
  %v208 = vadd.f32 0.0, %v207
  %v209 = vpop.f32.mrb[0].mxu0
  %v210 = vpop.f32.mrb[0].mxu0
  %v211 = vadd.f32 0.0, %v210
  %v212 = vpop.f32.mrb[0].mxu0
  %213 = vmatprep.mubr.bf16.mxu0 0
  %214 = vmatmul.mubr.bf16.gmra.mrb[0].mxu0 %v67
  %v215 = vpop.f32.mrb[0].mxu0
  %v216 = vadd.f32 0.0, %v215
  %v217 = vpop.f32.mrb[0].mxu0
  %v218 = vpop.f32.mrb[0].mxu0
  %v219 = vadd.f32 0.0, %v218
  %v220 = vpop.f32.mrb[0].mxu0
  %221 = vmatprep.mubr.bf16.mxu0 0
  %222 = vmatmul.mubr.bf16.gmra.mrb[0].mxu0 %v68
  %v223 = vpop.f32.mrb[0].mxu0
  %v224 = vadd.f32 0.0, %v223
  %v225 = vpop.f32.mrb[0].mxu0
  %v226 = vpop.f32.mrb[0].mxu0
  %v227 = vadd.f32 0.0, %v226
  %v228 = vpop.f32.mrb[0].mxu0
  %229 = vdwg.mxu0
  %v230 = vadd.f32 %v41, %v168
  %v231 = vadd.f32 %v42, %v171
  %v232 = vadd.f32 %v43, %v176
  %v233 = vadd.f32 %v44, %v179
  %v234 = vadd.f32 %v45, %v184
  %v235 = vadd.f32 %v46, %v187
  %v236 = vadd.f32 %v47, %v192
  %v237 = vadd.f32 %v48, %v195
  %v238 = vadd.f32 %v49, %v200
  %v239 = vadd.f32 %v50, %v203
  %v240 = vadd.f32 %v51, %v208
  %v241 = vadd.f32 %v52, %v211
  %v242 = vadd.f32 %v53, %v216
  %v243 = vadd.f32 %v54, %v219
  %v244 = vadd.f32 %v55, %v224
  %v245 = vadd.f32 %v56, %v227
  %246 = vst [vmem:[#allocation2] sm:$0xff] %v230
  %247 = vst [vmem:[#allocation2 + $0x8] sm:$0xff] %v231
  %248 = vst [vmem:[#allocation2 + $0x10] sm:$0xff] %v232
  %249 = vst [vmem:[#allocation2 + $0x18] sm:$0xff] %v233
  %250 = vst [vmem:[#allocation2 + $0x20] sm:$0xff] %v234
  %251 = vst [vmem:[#allocation2 + $0x28] sm:$0xff] %v235
  %252 = vst [vmem:[#allocation2 + $0x30] sm:$0xff] %v236
  %253 = vst [vmem:[#allocation2 + $0x38] sm:$0xff] %v237
  %254 = vst [vmem:[#allocation2 + $0x40] sm:$0xff] %v238
  %255 = vst [vmem:[#allocation2 + $0x48] sm:$0xff] %v239
  %256 = vst [vmem:[#allocation2 + $0x50] sm:$0xff] %v240
  %257 = vst [vmem:[#allocation2 + $0x58] sm:$0xff] %v241
  %258 = vst [vmem:[#allocation2 + $0x60] sm:$0xff] %v242
  %259 = vst [vmem:[#allocation2 + $0x68] sm:$0xff] %v243
  %260 = vst [vmem:[#allocation2 + $0x70] sm:$0xff] %v244
  %261 = vst [vmem:[#allocation2 + $0x78] sm:$0xff] %v245
  // Predicated region
  $region26: #{edge_gcn_forward.3} parent=0 // pred_check
    %p262 = pneg %p21
  $region27: #{edge_gcn_forward.3} parent=0 // pred_check_branch
    %264 = sbr.rel (%p262) target = $region29
  $region28: #{edge_gcn_forward.3} parent=0 // pred_region
    %v265 = vld [vmem:[#allocation2] sm:$0xff]
    %v266 = vld [vmem:[#allocation2 + $0x8] sm:$0xff]
    %v267 = vld [vmem:[#allocation2 + $0x10] sm:$0xff]
    %v268 = vld [vmem:[#allocation2 + $0x18] sm:$0xff]
    %v269 = vld [vmem:[#allocation2 + $0x20] sm:$0xff]
    %v270 = vld [vmem:[#allocation2 + $0x28] sm:$0xff]
    %v271 = vld [vmem:[#allocation2 + $0x30] sm:$0xff]
    %v272 = vld [vmem:[#allocation2 + $0x38] sm:$0xff]
    %v273 = vld [vmem:[#allocation2 + $0x40] sm:$0xff]
    %v274 = vld [vmem:[#allocation2 + $0x48] sm:$0xff]
    %v275 = vld [vmem:[#allocation2 + $0x50] sm:$0xff]
    %v276 = vld [vmem:[#allocation2 + $0x58] sm:$0xff]
    %v277 = vld [vmem:[#allocation2 + $0x60] sm:$0xff]
    %v278 = vld [vmem:[#allocation2 + $0x68] sm:$0xff]
    %v279 = vld [vmem:[#allocation2 + $0x70] sm:$0xff]
    %v280 = vld [vmem:[#allocation2 + $0x78] sm:$0xff]
    %v281 = vld [vmem:[%s2] sm:$0xf]
    %v282 = vld [vmem:[%s2 + $0x4] sm:$0xf]
    %v283 = vld [vmem:[%s2 + $0x8] sm:$0xf]
    %v284 = vld [vmem:[%s2 + $0xc] sm:$0xf]
    %v285 = vld [vmem:[%s2 + $0x10] sm:$0xf]
    %v286 = vld [vmem:[%s2 + $0x14] sm:$0xf]
    %v287 = vld [vmem:[%s2 + $0x18] sm:$0xf]
    %v288 = vld [vmem:[%s2 + $0x1c] sm:$0xf]
    %v289 = vld [vmem:[%s2 + $0x20] sm:$0xf]
    %v290 = vld [vmem:[%s2 + $0x24] sm:$0xf]
    %v291 = vld [vmem:[%s2 + $0x28] sm:$0xf]
    %v292 = vld [vmem:[%s2 + $0x2c] sm:$0xf]
    %v293 = vld [vmem:[%s2 + $0x30] sm:$0xf]
    %v294 = vld [vmem:[%s2 + $0x34] sm:$0xf]
    %v295 = vld [vmem:[%s2 + $0x38] sm:$0xf]
    %v296 = vld [vmem:[%s2 + $0x3c] sm:$0xf]
    %v297 = vunpack.c.l.bf16 %v281
    %v298 = vunpack.c.l.bf16 %v282
    %v299 = vunpack.c.l.bf16 %v283
    %v300 = vunpack.c.l.bf16 %v284
    %v301 = vunpack.c.l.bf16 %v285
    %v302 = vunpack.c.l.bf16 %v286
    %v303 = vunpack.c.l.bf16 %v287
    %v304 = vunpack.c.l.bf16 %v288
    %v305 = vunpack.c.l.bf16 %v289
    %v306 = vunpack.c.l.bf16 %v290
    %v307 = vunpack.c.l.bf16 %v291
    %v308 = vunpack.c.l.bf16 %v292
    %v309 = vunpack.c.l.bf16 %v293
    %v310 = vunpack.c.l.bf16 %v294
    %v311 = vunpack.c.l.bf16 %v295
    %v312 = vunpack.c.l.bf16 %v296
    %v313 = vld [vmem:[%s3] sm:$0x1]
    %v315 = vlaneseq
    %v316 = vshrl.u32 %v315, 7
    %v317 = vsub.s32 0, %v316
    %v318 = vrot.slane %v313, %v317
    %320 = vmatprep.subr.mxu0 0.0
    %321 = vmatpush1.msra.mxu0 %v297
    %322 = vmatprep.subr.mxu0 0.0
    %323 = vmatpush1.msra.mxu0 %v298
    %324 = vmatprep.subr.mxu0 0.0
    %325 = vmatpush1.msra.mxu0 %v299
    %326 = vmatprep.subr.mxu0 0.0
    %327 = vmatpush1.msra.mxu0 %v300
    %328 = vmatprep.subr.mxu0 0.0
    %329 = vmatpush1.msra.mxu0 %v301
    %330 = vmatprep.subr.mxu0 0.0
    %331 = vmatpush1.msra.mxu0 %v302
    %332 = vmatprep.subr.mxu0 0.0
    %333 = vmatpush1.msra.mxu0 %v303
    %334 = vmatprep.subr.mxu0 0.0
    %335 = vmatpush1.msra.mxu0 %v304
    %336 = vmatprep.subr.mxu0 0.0
    %337 = vmatpush1.msra.mxu0 %v305
    %338 = vmatprep.subr.mxu0 0.0
    %339 = vmatpush1.msra.mxu0 %v306
    %340 = vmatprep.subr.mxu0 0.0
    %341 = vmatpush1.msra.mxu0 %v307
    %342 = vmatprep.subr.mxu0 0.0
    %343 = vmatpush1.msra.mxu0 %v308
    %344 = vmatprep.subr.mxu0 0.0
    %345 = vmatpush1.msra.mxu0 %v309
    %346 = vmatprep.subr.mxu0 0.0
    %347 = vmatpush1.msra.mxu0 %v310
    %348 = vmatprep.subr.mxu0 0.0
    %349 = vmatpush1.msra.mxu0 %v311
    %350 = vmatprep.subr.mxu0 0.0
    %351 = vmatpush1.msra.mxu0 %v312
    %352 = vmatprep.subr.mxu0 0.0
    %353 = vmatpush1.msra.mxu0 0.0
    %354 = vmatprep.subr.mxu0 0.0
    %355 = vmatpush1.msra.mxu0 0.0
    %356 = vmatprep.subr.mxu0 0.0
    %357 = vmatpush1.msra.mxu0 0.0
    %358 = vmatprep.subr.mxu0 0.0
    %359 = vmatpush1.msra.mxu0 0.0
    %360 = vmatprep.subr.mxu0 0.0
    %361 = vmatpush1.msra.mxu0 0.0
    %362 = vmatprep.subr.mxu0 0.0
    %363 = vmatpush1.msra.mxu0 0.0
    %364 = vmatprep.subr.mxu0 0.0
    %365 = vmatpush1.msra.mxu0 0.0
    %366 = vmatprep.subr.mxu0 0.0
    %367 = vmatpush1.msra.mxu0 0.0
    %368 = vmatprep.subr.mxu0 0.0
    %369 = vmatpush1.msra.mxu0 0.0
    %370 = vmatprep.subr.mxu0 0.0
    %371 = vmatpush1.msra.mxu0 0.0
    %372 = vmatprep.subr.mxu0 0.0
    %373 = vmatpush1.msra.mxu0 0.0
    %374 = vmatprep.subr.mxu0 0.0
    %375 = vmatpush1.msra.mxu0 0.0
    %376 = vmatprep.subr.mxu0 0.0
    %377 = vmatpush1.msra.mxu0 0.0
    %378 = vmatprep.subr.mxu0 0.0
    %379 = vmatpush1.msra.mxu0 0.0
    %380 = vmatprep.subr.mxu0 0.0
    %381 = vmatpush1.msra.mxu0 0.0
    %382 = vmatprep.subr.mxu0 0.0
    %383 = vmatpush1.msra.mxu0 0.0
    %384 = vmatprep.mubr.f32.mxu0 0.0
    %385 = vmatmul.mubr.f32.gmra.mrb[0].mxu0 %v265
    %v386 = vpop.f32.mrb[0].mxu0
    %v387 = vadd.f32 %v318, %v386
    %v388 = vpop.f32.mrb[0].mxu0
    %389 = vmatprep.mubr.f32.mxu0 0.0
    %390 = vmatmul.mubr.f32.gmra.mrb[0].mxu0 %v266
    %v391 = vpop.f32.mrb[0].mxu0
    %v392 = vadd.f32 %v318, %v391
    %v393 = vpop.f32.mrb[0].mxu0
    %394 = vmatprep.mubr.f32.mxu0 0.0
    %395 = vmatmul.mubr.f32.gmra.mrb[0].mxu0 %v267
    %v396 = vpop.f32.mrb[0].mxu0
    %v397 = vadd.f32 %v318, %v396
    %v398 = vpop.f32.mrb[0].mxu0
    %399 = vmatprep.mubr.f32.mxu0 0.0
    %400 = vmatmul.mubr.f32.gmra.mrb[0].mxu0 %v268
    %v401 = vpop.f32.mrb[0].mxu0
    %v402 = vadd.f32 %v318, %v401
    %v403 = vpop.f32.mrb[0].mxu0
    %404 = vmatprep.mubr.f32.mxu0 0.0
    %405 = vmatmul.mubr.f32.gmra.mrb[0].mxu0 %v269
    %v406 = vpop.f32.mrb[0].mxu0
    %v407 = vadd.f32 %v318, %v406
    %v408 = vpop.f32.mrb[0].mxu0
    %409 = vmatprep.mubr.f32.mxu0 0.0
    %410 = vmatmul.mubr.f32.gmra.mrb[0].mxu0 %v270
    %v411 = vpop.f32.mrb[0].mxu0
    %v412 = vadd.f32 %v318, %v411
    %v413 = vpop.f32.mrb[0].mxu0
    %414 = vmatprep.mubr.f32.mxu0 0.0
    %415 = vmatmul.mubr.f32.gmra.mrb[0].mxu0 %v271
    %v416 = vpop.f32.mrb[0].mxu0
    %v417 = vadd.f32 %v318, %v416
    %v418 = vpop.f32.mrb[0].mxu0
    %419 = vmatprep.mubr.f32.mxu0 0.0
    %420 = vmatmul.mubr.f32.gmra.mrb[0].mxu0 %v272
    %v421 = vpop.f32.mrb[0].mxu0
    %v422 = vadd.f32 %v318, %v421
    %v423 = vpop.f32.mrb[0].mxu0
    %424 = vmatprep.mubr.f32.mxu0 0.0
    %425 = vmatmul.mubr.f32.gmra.mrb[0].mxu0 %v273
    %v426 = vpop.f32.mrb[0].mxu0
    %v427 = vadd.f32 %v318, %v426
    %v428 = vpop.f32.mrb[0].mxu0
    %429 = vmatprep.mubr.f32.mxu0 0.0
    %430 = vmatmul.mubr.f32.gmra.mrb[0].mxu0 %v274
    %v431 = vpop.f32.mrb[0].mxu0
    %v432 = vadd.f32 %v318, %v431
    %v433 = vpop.f32.mrb[0].mxu0
    %434 = vmatprep.mubr.f32.mxu0 0.0
    %435 = vmatmul.mubr.f32.gmra.mrb[0].mxu0 %v275
    %v436 = vpop.f32.mrb[0].mxu0
    %v437 = vadd.f32 %v318, %v436
    %v438 = vpop.f32.mrb[0].mxu0
    %439 = vmatprep.mubr.f32.mxu0 0.0
    %440 = vmatmul.mubr.f32.gmra.mrb[0].mxu0 %v276
    %v441 = vpop.f32.mrb[0].mxu0
    %v442 = vadd.f32 %v318, %v441
    %v443 = vpop.f32.mrb[0].mxu0
    %444 = vmatprep.mubr.f32.mxu0 0.0
    %445 = vmatmul.mubr.f32.gmra.mrb[0].mxu0 %v277
    %v446 = vpop.f32.mrb[0].mxu0
    %v447 = vadd.f32 %v318, %v446
    %v448 = vpop.f32.mrb[0].mxu0
    %449 = vmatprep.mubr.f32.mxu0 0.0
    %450 = vmatmul.mubr.f32.gmra.mrb[0].mxu0 %v278
    %v451 = vpop.f32.mrb[0].mxu0
    %v452 = vadd.f32 %v318, %v451
    %v453 = vpop.f32.mrb[0].mxu0
    %454 = vmatprep.mubr.f32.mxu0 0.0
    %455 = vmatmul.mubr.f32.gmra.mrb[0].mxu0 %v279
    %v456 = vpop.f32.mrb[0].mxu0
    %v457 = vadd.f32 %v318, %v456
    %v458 = vpop.f32.mrb[0].mxu0
    %459 = vmatprep.mubr.f32.mxu0 0.0
    %460 = vmatmul.mubr.f32.gmra.mrb[0].mxu0 %v280
    %v461 = vpop.f32.mrb[0].mxu0
    %v462 = vadd.f32 %v318, %v461
    %v463 = vpop.f32.mrb[0].mxu0
    %464 = vdwg.mxu0
    %vm465 = vcmp.gt.f32.partialorder %v387, 0.0
    %vm466 = vcmp.gt.f32.partialorder %v392, 0.0
    %vm467 = vcmp.gt.f32.partialorder %v397, 0.0
    %vm468 = vcmp.gt.f32.partialorder %v402, 0.0
    %vm469 = vcmp.gt.f32.partialorder %v407, 0.0
    %vm470 = vcmp.gt.f32.partialorder %v412, 0.0
    %vm471 = vcmp.gt.f32.partialorder %v417, 0.0
    %vm472 = vcmp.gt.f32.partialorder %v422, 0.0
    %vm473 = vcmp.gt.f32.partialorder %v427, 0.0
    %vm474 = vcmp.gt.f32.partialorder %v432, 0.0
    %vm475 = vcmp.gt.f32.partialorder %v437, 0.0
    %vm476 = vcmp.gt.f32.partialorder %v442, 0.0
    %vm477 = vcmp.gt.f32.partialorder %v447, 0.0
    %vm478 = vcmp.gt.f32.partialorder %v452, 0.0
    %vm479 = vcmp.gt.f32.partialorder %v457, 0.0
    %vm480 = vcmp.gt.f32.partialorder %v462, 0.0
    %v481 = vmul.f32 %v387, 0.2
    %v482 = vmul.f32 %v392, 0.2
    %v483 = vmul.f32 %v397, 0.2
    %v484 = vmul.f32 %v402, 0.2
    %v485 = vmul.f32 %v407, 0.2
    %v486 = vmul.f32 %v412, 0.2
    %v487 = vmul.f32 %v417, 0.2
    %v488 = vmul.f32 %v422, 0.2
    %v489 = vmul.f32 %v427, 0.2
    %v490 = vmul.f32 %v432, 0.2
    %v491 = vmul.f32 %v437, 0.2
    %v492 = vmul.f32 %v442, 0.2
    %v493 = vmul.f32 %v447, 0.2
    %v494 = vmul.f32 %v452, 0.2
    %v495 = vmul.f32 %v457, 0.2
    %v496 = vmul.f32 %v462, 0.2
    %v497 = vsel %vm465, %v387, %v481
    %v498 = vsel %vm466, %v392, %v482
    %v499 = vsel %vm467, %v397, %v483
    %v500 = vsel %vm468, %v402, %v484
    %v501 = vsel %vm469, %v407, %v485
    %v502 = vsel %vm470, %v412, %v486
    %v503 = vsel %vm471, %v417, %v487
    %v504 = vsel %vm472, %v422, %v488
    %v505 = vsel %vm473, %v427, %v489
    %v506 = vsel %vm474, %v432, %v490
    %v507 = vsel %vm475, %v437, %v491
    %v508 = vsel %vm476, %v442, %v492
    %v509 = vsel %vm477, %v447, %v493
    %v510 = vsel %vm478, %v452, %v494
    %v511 = vsel %vm479, %v457, %v495
    %v512 = vsel %vm480, %v462, %v496
    %v513 = vld [vmem:[%s4] sm:$0xf]
    %v514 = vld [vmem:[%s4 + $0x4] sm:$0xf]
    %v515 = vld [vmem:[%s4 + $0x8] sm:$0xf]
    %v516 = vld [vmem:[%s4 + $0xc] sm:$0xf]
    %v517 = vld [vmem:[%s4 + $0x10] sm:$0xf]
    %v518 = vld [vmem:[%s4 + $0x14] sm:$0xf]
    %v519 = vld [vmem:[%s4 + $0x18] sm:$0xf]
    %v520 = vld [vmem:[%s4 + $0x1c] sm:$0xf]
    %v521 = vld [vmem:[%s4 + $0x20] sm:$0xf]
    %v522 = vld [vmem:[%s4 + $0x24] sm:$0xf]
    %v523 = vld [vmem:[%s4 + $0x28] sm:$0xf]
    %v524 = vld [vmem:[%s4 + $0x2c] sm:$0xf]
    %v525 = vld [vmem:[%s4 + $0x30] sm:$0xf]
    %v526 = vld [vmem:[%s4 + $0x34] sm:$0xf]
    %v527 = vld [vmem:[%s4 + $0x38] sm:$0xf]
    %v528 = vld [vmem:[%s4 + $0x3c] sm:$0xf]
    %v529 = vunpack.c.l.bf16 %v513
    %v530 = vunpack.c.l.bf16 %v514
    %v531 = vunpack.c.l.bf16 %v515
    %v532 = vunpack.c.l.bf16 %v516
    %v533 = vunpack.c.l.bf16 %v517
    %v534 = vunpack.c.l.bf16 %v518
    %v535 = vunpack.c.l.bf16 %v519
    %v536 = vunpack.c.l.bf16 %v520
    %v537 = vunpack.c.l.bf16 %v521
    %v538 = vunpack.c.l.bf16 %v522
    %v539 = vunpack.c.l.bf16 %v523
    %v540 = vunpack.c.l.bf16 %v524
    %v541 = vunpack.c.l.bf16 %v525
    %v542 = vunpack.c.l.bf16 %v526
    %v543 = vunpack.c.l.bf16 %v527
    %v544 = vunpack.c.l.bf16 %v528
    %545 = vmatprep.subr.mxu0 0.0
    %546 = vmatpush1.msra.mxu0 %v529
    %547 = vmatprep.subr.mxu0 0.0
    %548 = vmatpush1.msra.mxu0 %v530
    %549 = vmatprep.subr.mxu0 0.0
    %550 = vmatpush1.msra.mxu0 %v531
    %551 = vmatprep.subr.mxu0 0.0
    %552 = vmatpush1.msra.mxu0 %v532
    %553 = vmatprep.subr.mxu0 0.0
    %554 = vmatpush1.msra.mxu0 %v533
    %555 = vmatprep.subr.mxu0 0.0
    %556 = vmatpush1.msra.mxu0 %v534
    %557 = vmatprep.subr.mxu0 0.0
    %558 = vmatpush1.msra.mxu0 %v535
    %559 = vmatprep.subr.mxu0 0.0
    %560 = vmatpush1.msra.mxu0 %v536
    %561 = vmatprep.subr.mxu0 0.0
    %562 = vmatpush1.msra.mxu0 %v537
    %563 = vmatprep.subr.mxu0 0.0
    %564 = vmatpush1.msra.mxu0 %v538
    %565 = vmatprep.subr.mxu0 0.0
    %566 = vmatpush1.msra.mxu0 %v539
    %567 = vmatprep.subr.mxu0 0.0
    %568 = vmatpush1.msra.mxu0 %v540
    %569 = vmatprep.subr.mxu0 0.0
    %570 = vmatpush1.msra.mxu0 %v541
    %571 = vmatprep.subr.mxu0 0.0
    %572 = vmatpush1.msra.mxu0 %v542
    %573 = vmatprep.subr.mxu0 0.0
    %574 = vmatpush1.msra.mxu0 %v543
    %575 = vmatprep.subr.mxu0 0.0
    %576 = vmatpush1.msra.mxu0 %v544
    %577 = vmatprep.subr.mxu0 0.0
    %578 = vmatpush1.msra.mxu0 0.0
    %579 = vmatprep.subr.mxu0 0.0
    %580 = vmatpush1.msra.mxu0 0.0
    %581 = vmatprep.subr.mxu0 0.0
    %582 = vmatpush1.msra.mxu0 0.0
    %583 = vmatprep.subr.mxu0 0.0
    %584 = vmatpush1.msra.mxu0 0.0
    %585 = vmatprep.subr.mxu0 0.0
    %586 = vmatpush1.msra.mxu0 0.0
    %587 = vmatprep.subr.mxu0 0.0
    %588 = vmatpush1.msra.mxu0 0.0
    %589 = vmatprep.subr.mxu0 0.0
    %590 = vmatpush1.msra.mxu0 0.0
    %591 = vmatprep.subr.mxu0 0.0
    %592 = vmatpush1.msra.mxu0 0.0
    %593 = vmatprep.subr.mxu0 0.0
    %594 = vmatpush1.msra.mxu0 0.0
    %595 = vmatprep.subr.mxu0 0.0
    %596 = vmatpush1.msra.mxu0 0.0
    %597 = vmatprep.subr.mxu0 0.0
    %598 = vmatpush1.msra.mxu0 0.0
    %599 = vmatprep.subr.mxu0 0.0
    %600 = vmatpush1.msra.mxu0 0.0
    %601 = vmatprep.subr.mxu0 0.0
    %602 = vmatpush1.msra.mxu0 0.0
    %603 = vmatprep.subr.mxu0 0.0
    %604 = vmatpush1.msra.mxu0 0.0
    %605 = vmatprep.subr.mxu0 0.0
    %606 = vmatpush1.msra.mxu0 0.0
    %607 = vmatprep.subr.mxu0 0.0
    %608 = vmatpush1.msra.mxu0 0.0
    %609 = vmatprep.mubr.f32.mxu0 0.0
    %610 = vmatmul.mubr.f32.gmra.mrb[0].mxu0 %v497
    %v611 = vpop.f32.mrb[0].mxu0
    %v612 = vadd.f32 0.0, %v611
    %v613 = vpop.f32.mrb[0].mxu0
    %614 = vmatprep.mubr.f32.mxu0 0.0
    %615 = vmatmul.mubr.f32.gmra.mrb[0].mxu0 %v498
    %v616 = vpop.f32.mrb[0].mxu0
    %v617 = vadd.f32 0.0, %v616
    %v618 = vpop.f32.mrb[0].mxu0
    %619 = vmatprep.mubr.f32.mxu0 0.0
    %620 = vmatmul.mubr.f32.gmra.mrb[0].mxu0 %v499
    %v621 = vpop.f32.mrb[0].mxu0
    %v622 = vadd.f32 0.0, %v621
    %v623 = vpop.f32.mrb[0].mxu0
    %624 = vmatprep.mubr.f32.mxu0 0.0
    %625 = vmatmul.mubr.f32.gmra.mrb[0].mxu0 %v500
    %v626 = vpop.f32.mrb[0].mxu0
    %v627 = vadd.f32 0.0, %v626
    %v628 = vpop.f32.mrb[0].mxu0
    %629 = vmatprep.mubr.f32.mxu0 0.0
    %630 = vmatmul.mubr.f32.gmra.mrb[0].mxu0 %v501
    %v631 = vpop.f32.mrb[0].mxu0
    %v632 = vadd.f32 0.0, %v631
    %v633 = vpop.f32.mrb[0].mxu0
    %634 = vmatprep.mubr.f32.mxu0 0.0
    %635 = vmatmul.mubr.f32.gmra.mrb[0].mxu0 %v502
    %v636 = vpop.f32.mrb[0].mxu0
    %v637 = vadd.f32 0.0, %v636
    %v638 = vpop.f32.mrb[0].mxu0
    %639 = vmatprep.mubr.f32.mxu0 0.0
    %640 = vmatmul.mubr.f32.gmra.mrb[0].mxu0 %v503
    %v641 = vpop.f32.mrb[0].mxu0
    %v642 = vadd.f32 0.0, %v641
    %v643 = vpop.f32.mrb[0].mxu0
    %644 = vmatprep.mubr.f32.mxu0 0.0
    %645 = vmatmul.mubr.f32.gmra.mrb[0].mxu0 %v504
    %v646 = vpop.f32.mrb[0].mxu0
    %v647 = vadd.f32 0.0, %v646
    %v648 = vpop.f32.mrb[0].mxu0
    %649 = vmatprep.mubr.f32.mxu0 0.0
    %650 = vmatmul.mubr.f32.gmra.mrb[0].mxu0 %v505
    %v651 = vpop.f32.mrb[0].mxu0
    %v652 = vadd.f32 0.0, %v651
    %v653 = vpop.f32.mrb[0].mxu0
    %654 = vmatprep.mubr.f32.mxu0 0.0
    %655 = vmatmul.mubr.f32.gmra.mrb[0].mxu0 %v506
    %v656 = vpop.f32.mrb[0].mxu0
    %v657 = vadd.f32 0.0, %v656
    %v658 = vpop.f32.mrb[0].mxu0
    %659 = vmatprep.mubr.f32.mxu0 0.0
    %660 = vmatmul.mubr.f32.gmra.mrb[0].mxu0 %v507
    %v661 = vpop.f32.mrb[0].mxu0
    %v662 = vadd.f32 0.0, %v661
    %v663 = vpop.f32.mrb[0].mxu0
    %664 = vmatprep.mubr.f32.mxu0 0.0
    %665 = vmatmul.mubr.f32.gmra.mrb[0].mxu0 %v508
    %v666 = vpop.f32.mrb[0].mxu0
    %v667 = vadd.f32 0.0, %v666
    %v668 = vpop.f32.mrb[0].mxu0
    %669 = vmatprep.mubr.f32.mxu0 0.0
    %670 = vmatmul.mubr.f32.gmra.mrb[0].mxu0 %v509
    %v671 = vpop.f32.mrb[0].mxu0
    %v672 = vadd.f32 0.0, %v671
    %v673 = vpop.f32.mrb[0].mxu0
    %674 = vmatprep.mubr.f32.mxu0 0.0
    %675 = vmatmul.mubr.f32.gmra.mrb[0].mxu0 %v510
    %v676 = vpop.f32.mrb[0].mxu0
    %v677 = vadd.f32 0.0, %v676
    %v678 = vpop.f32.mrb[0].mxu0
    %679 = vmatprep.mubr.f32.mxu0 0.0
    %680 = vmatmul.mubr.f32.gmra.mrb[0].mxu0 %v511
    %v681 = vpop.f32.mrb[0].mxu0
    %v682 = vadd.f32 0.0, %v681
    %v683 = vpop.f32.mrb[0].mxu0
    %684 = vmatprep.mubr.f32.mxu0 0.0
    %685 = vmatmul.mubr.f32.gmra.mrb[0].mxu0 %v512
    %v686 = vpop.f32.mrb[0].mxu0
    %v687 = vadd.f32 0.0, %v686
    %v688 = vpop.f32.mrb[0].mxu0
    %689 = vdwg.mxu0
    %690 = vst [vmem:[%s5] sm:$0xff] %v612
    %691 = vst [vmem:[%s5 + $0x8] sm:$0xff] %v617
    %692 = vst [vmem:[%s5 + $0x10] sm:$0xff] %v622
    %693 = vst [vmem:[%s5 + $0x18] sm:$0xff] %v627
    %694 = vst [vmem:[%s5 + $0x20] sm:$0xff] %v632
    %695 = vst [vmem:[%s5 + $0x28] sm:$0xff] %v637
    %696 = vst [vmem:[%s5 + $0x30] sm:$0xff] %v642
    %697 = vst [vmem:[%s5 + $0x38] sm:$0xff] %v647
    %698 = vst [vmem:[%s5 + $0x40] sm:$0xff] %v652
    %699 = vst [vmem:[%s5 + $0x48] sm:$0xff] %v657
    %700 = vst [vmem:[%s5 + $0x50] sm:$0xff] %v662
    %701 = vst [vmem:[%s5 + $0x58] sm:$0xff] %v667
    %702 = vst [vmem:[%s5 + $0x60] sm:$0xff] %v672
    %703 = vst [vmem:[%s5 + $0x68] sm:$0xff] %v677
    %704 = vst [vmem:[%s5 + $0x70] sm:$0xff] %v682
    %705 = vst [vmem:[%s5 + $0x78] sm:$0xff] %v687
  $region29: #{edge_gcn_forward.3} parent=0 // pred_fallthru
    _
  // Predicated region
  $region30: #{edge_gcn_forward.3} parent=0 // pred_check
    _
  $region31: #{edge_gcn_forward.3} parent=0 // pred_check_branch
    %707 = sbr.rel (0) target = $region33
  $region32: #{edge_gcn_forward.3} parent=0 // pred_region
    _
  $region33: #{edge_gcn_forward.3} parent=0 // pred_fallthru
    _
  // Predicated region
  $region34: #{edge_gcn_forward.3} parent=0 // pred_check
    _
  $region35: #{edge_gcn_forward.3} parent=0 // pred_check_branch
    %709 = sbr.rel (0) target = $region37
  $region36: #{edge_gcn_forward.3} parent=0 // pred_region
    _
  $region37: #{edge_gcn_forward.3} parent=0 // pred_fallthru
    _

</llo_original>
